<compile_context>
chip_gen: v5e
topology: v5e:2x2
jax: 0.10.0
libtpu: 0.0.40
codegen_flags: <defaults>
</compile_context>

<pallas_src>
import jax
import jax.numpy as jnp
from jax.experimental import pallas as pl
from jax.experimental.pallas import tpu as pltpu

LANE = 128  # TPU lane width; hidden feature dims are padded to this once.


def _round_up(n: int, m: int) -> int:
    return ((n + m - 1) // m) * m


def _device_kind() -> str:
    try:
        return jax.devices()[0].device_kind.lower()
    except Exception:
        return ""


# --------------------------------------------------------------------------
# Kernel
# --------------------------------------------------------------------------
def _make_mlp_kernel(num_layers: int, silu_in_bf16: bool):
    """Fused MLP kernel: all Linear(+SiLU) layers of one batch tile."""

    def kernel(*refs):
        # refs = (x_ref, w1, b1, w2, b2, ..., wL, bL, o_ref)
        x_ref = refs[0]
        o_ref = refs[-1]
        params = refs[1:-1]

        h = x_ref[...].astype(jnp.bfloat16)  # bf16 operand for the first matmul
        for layer in range(num_layers):
            w = params[2 * layer][...]       # bf16 (in, out) — hidden dims lane-padded
            b = params[2 * layer + 1][...]   # f32  (1, out)
            # bf16 x bf16 matmul with f32 accumulation on the MXU.
            acc = jnp.dot(h, w, preferred_element_type=jnp.float32) + b
            if layer < num_layers - 1:
                if silu_in_bf16:
                    # v6e/v7x: bf16 VPU + EUP -> halve activation vreg/VMEM width.
                    a = acc.astype(jnp.bfloat16)
                    h = a * jax.lax.logistic(a)
                else:
                    # v5e: no bf16 VPU/EUP — keep element-wise math in f32.
                    acc = acc * jax.lax.logistic(acc)
                    h = acc.astype(jnp.bfloat16)
            else:
                h = acc  # out_activation is Identity
        o_ref[...] = h.astype(o_ref.dtype)

    return kernel


# --------------------------------------------------------------------------
# Parameter preparation (call ONCE; reuse across forward calls)
# --------------------------------------------------------------------------
def prepare_params(weights, biases):
    """Pad hidden dims to the 128-lane width, cast weights to bf16 (biases f32).

    The first layer's input dim and the last layer's output dim are kept
    unpadded so x and the output need no padding/slicing per call.
    """
    n = len(weights)
    w_p, b_p = [], []
    for i, (w, b) in enumerate(zip(weights, biases)):
        ki, ko = w.shape
        kip = ki if i == 0 else _round_up(ki, LANE)
        kop = ko if i == n - 1 else _round_up(ko, LANE)
        wp = jnp.zeros((kip, kop), jnp.bfloat16).at[:ki, :ko].set(
            w.astype(jnp.bfloat16))
        bp = jnp.zeros((1, kop), jnp.float32).at[:, :ko].set(
            b.astype(jnp.float32).reshape(1, ko))
        w_p.append(wp)
        b_p.append(bp)
    return w_p, b_p


# --------------------------------------------------------------------------
# Forward wrapper
# --------------------------------------------------------------------------
def _pick_tile(M: int, tile_m: int) -> int:
    if M <= 8:
        return M  # block == full array dim is always legal
    if M % 8 == 0:
        tile = min(tile_m, M)
    else:
        tile = min(tile_m, (M // 8) * 8)  # largest multiple of 8 <= M
    tile = max(8, (tile // 8) * 8)
    # Guarantee >=2 grid steps so both v7x TensorCores get work
    # (negligible cost on single-TC v5e/v6e).
    if pl.cdiv(M, tile) < 2 and M >= 16:
        tile = _round_up(pl.cdiv(M, 2), 8)
    return tile


def mlp_forward(x, w_p, b_p, *, tile_m: int = 512, out_dtype=jnp.float32):
    """Run the fused MLP Pallas kernel.

    Args:
      x:    (M, input_channels) array (f32 or bf16); cast to bf16 in-kernel.
      w_p:  prepared weights from prepare_params() (bf16, hidden dims padded).
      b_p:  prepared biases from prepare_params() (f32, (1, out)).
      tile_m: max batch tile size (clamped / VMEM-adapted internally).
      out_dtype: explicit output dtype (use jnp.bfloat16 to halve writeback).
    """
    num_layers = len(w_p)
    M, in_ch = x.shape
    out_ch = int(w_p[-1].shape[1])
    hid_pad = int(w_p[0].shape[1])
    out_itemsize = jnp.dtype(out_dtype).itemsize

    kind = _device_kind()
    is_v5 = "v5" in kind
    is_v7 = ("v7" in kind) or ("tpu7" in kind) or ("7x" in kind)
    vmem_cap = (48 << 20) if is_v7 else (96 << 20)  # v7x has 64 MiB/TC physical

    param_bytes = (sum(int(w.size) * 2 for w in w_p)
                   + sum(int(b.size) * 4 for b in b_p))
    # TODO(synk): if resident params alone exceed the VMEM cap (multi-thousand
    # hidden dims on v7x), switch to an emit_pipeline / K-tiled grid over the
    # layer weights instead of keeping them all resident.

    def vmem_needed(tile):
        return (2 * param_bytes                            # covers double-buffer fallback
                + 2 * tile * in_ch * 4                     # x tile (double-buffered, f32)
                + 2 * tile * out_ch * out_itemsize         # out tile (double-buffered)
                + 6 * tile * max(in_ch, hid_pad, out_ch) * 4)  # activation headroom

    tile = _pick_tile(M, tile_m)
    while tile > 8 and vmem_needed(tile) > vmem_cap:
        tile = max(8, ((tile // 2) // 8) * 8)
    vmem_limit = int(min(vmem_cap, max(vmem_needed(tile), 32 << 20)))

    grid = (pl.cdiv(M, tile),)
    kernel = _make_mlp_kernel(num_layers, silu_in_bf16=not is_v5)

    # Scheduling hint for XLA around the custom call (cheap, free win).
    flops = 2 * M * sum(int(w.shape[0]) * int(w.shape[1]) for w in w_p)
    transcendentals = M * hid_pad * max(num_layers - 1, 0)
    bytes_accessed = int(x.size) * x.dtype.itemsize + param_bytes + M * out_ch * out_itemsize
    cost = pl.CostEstimate(flops=flops, transcendentals=transcendentals,
                           bytes_accessed=bytes_accessed)

    def build(single_buffer_params: bool):
        in_specs = [pl.BlockSpec((tile, in_ch), lambda i: (i, 0))]
        for wp, bp in zip(w_p, b_p):
            # Constant block index -> loaded once, resident in VMEM. Single
            # buffering halves resident-parameter VMEM (double-buffering a
            # constant-index block is pure waste).
            kw = {"pipeline_mode": pl.Buffered(1)} if single_buffer_params else {}
            in_specs.append(pl.BlockSpec(wp.shape, lambda i: (0, 0), **kw))
            in_specs.append(pl.BlockSpec(bp.shape, lambda i: (0, 0), **kw))
        out_spec = pl.BlockSpec((tile, out_ch), lambda i: (i, 0))
        return pl.pallas_call(
            kernel,
            out_shape=jax.ShapeDtypeStruct((M, out_ch), out_dtype),
            grid=grid,
            in_specs=in_specs,
            out_specs=out_spec,
            cost_estimate=cost,
            compiler_params=pltpu.CompilerParams(
                dimension_semantics=("parallel",),
                vmem_limit_bytes=vmem_limit,
            ),
        )

    flat_params = []
    for wp, bp in zip(w_p, b_p):
        flat_params.extend([wp, bp])

    try:
        return build(True)(x, *flat_params)
    except Exception:
        # Fallback if this JAX version rejects Buffered(1) parameter blocks.
        return build(False)(x, *flat_params)


# --------------------------------------------------------------------------
# Init + pure-JAX reference
# --------------------------------------------------------------------------
def init_mlp_params(key, input_channels, hidden_channels, out_channels, num_layers):
    """Init matching the nn.Linear shapes of the module.

    Weights returned already transposed to (in, out); biases as (1, out).
    PyTorch-style uniform(-1/sqrt(fan_in), 1/sqrt(fan_in)).
    """
    dims = [input_channels] + [hidden_channels] * (num_layers - 1) + [out_channels]
    weights, biases = [], []
    for layer in range(num_layers):
        fan_in, fan_out = dims[layer], dims[layer + 1]
        key, kw, kb = jax.random.split(key, 3)
        bound = 1.0 / jnp.sqrt(jnp.float32(fan_in))
        w = jax.random.uniform(kw, (fan_in, fan_out), jnp.float32, -bound, bound)
        b = jax.random.uniform(kb, (1, fan_out), jnp.float32, -bound, bound)
        weights.append(w)
        biases.append(b)
    return weights, biases


def mlp_reference(x, weights, biases):
    """Pure-JAX f32 reference matching the PyTorch forward."""
    h = x
    n = len(weights)
    for layer in range(n):
        h = h @ weights[layer] + biases[layer]
        if layer < n - 1:
            h = h * jax.nn.sigmoid(h)  # SiLU
    return h  # Identity out_activation


if __name__ == "__main__":
    # Small, module-consistent shapes; M=128 -> >=2 grid steps are enforced.
    batch = 128
    input_channels = 32
    hidden_channels = 64
    out_channels = 16
    num_layers = 3  # Linear+SiLU, Linear+SiLU, Linear

    key = jax.random.PRNGKey(0)
    key, kx = jax.random.split(key)
    x = jax.random.normal(kx, (batch, input_channels), jnp.float32)

    weights, biases = init_mlp_params(
        key, input_channels, hidden_channels, out_channels, num_layers
    )
    # One-time parameter preparation (hoisted out of the forward pass).
    w_p, b_p = prepare_params(weights, biases)

    out = mlp_forward(x, w_p, b_p)
    out = jax.block_until_ready(out)

    ref = mlp_reference(x, weights, biases)
    assert out.shape == (batch, out_channels)
    assert out.dtype == jnp.float32
    # bf16 matmul operands with f32 accumulation vs an f32 reference.
    assert jnp.allclose(out, ref, atol=3e-2, rtol=3e-2), "mismatch vs reference"

    print("KERNEL_OK")
</pallas_src>

<mosaic_0001>
module attributes {stable_mosaic.version = 11 : i64} {
  func.func @kernel(%arg0: i32, %arg1: memref<64x32xf32, #tpu.memory_space<vmem>>, %arg2: memref<32x128xbf16, #tpu.memory_space<vmem>>, %arg3: memref<1x128xf32, #tpu.memory_space<vmem>>, %arg4: memref<128x128xbf16, #tpu.memory_space<vmem>>, %arg5: memref<1x128xf32, #tpu.memory_space<vmem>>, %arg6: memref<128x16xbf16, #tpu.memory_space<vmem>>, %arg7: memref<1x16xf32, #tpu.memory_space<vmem>>, %arg8: memref<64x16xf32, #tpu.memory_space<vmem>>) attributes {dimension_semantics = [#tpu.dimension_semantics<parallel>], iteration_bounds = array<i64: 2>, scalar_prefetch = 0 : i64, scratch_operands = 0 : i64, tpu.core_type = #tpu.core_type<tc>, window_params = [{transform_indices = @transform_0, window_bounds = array<i64: 64, 32>}, {pipeline_mode = #tpu.pipeline_mode<synchronous>, transform_indices = @transform_1, window_bounds = array<i64: 32, 128>}, {pipeline_mode = #tpu.pipeline_mode<synchronous>, transform_indices = @transform_2, window_bounds = array<i64: 1, 128>}, {pipeline_mode = #tpu.pipeline_mode<synchronous>, transform_indices = @transform_3, window_bounds = array<i64: 128, 128>}, {pipeline_mode = #tpu.pipeline_mode<synchronous>, transform_indices = @transform_4, window_bounds = array<i64: 1, 128>}, {pipeline_mode = #tpu.pipeline_mode<synchronous>, transform_indices = @transform_5, window_bounds = array<i64: 128, 16>}, {pipeline_mode = #tpu.pipeline_mode<synchronous>, transform_indices = @transform_6, window_bounds = array<i64: 1, 16>}, {transform_indices = @transform_7, window_bounds = array<i64: 64, 16>}]} {
    %c0 = arith.constant 0 : index
    %c0_0 = arith.constant 0 : index
    %0 = vector.load %arg1[%c0, %c0_0] : memref<64x32xf32, #tpu.memory_space<vmem>>, vector<64x32xf32>
    %1 = arith.truncf %0 : vector<64x32xf32> to vector<64x32xbf16>
    %c0_1 = arith.constant 0 : index
    %c0_2 = arith.constant 0 : index
    %2 = vector.load %arg2[%c0_1, %c0_2] : memref<32x128xbf16, #tpu.memory_space<vmem>>, vector<32x128xbf16>
    %c0_3 = arith.constant 0 : index
    %c0_4 = arith.constant 0 : index
    %3 = vector.load %arg3[%c0_3, %c0_4] : memref<1x128xf32, #tpu.memory_space<vmem>>, vector<1x128xf32>
    %cst = arith.constant dense<0.000000e+00> : vector<64x128xf32>
    %4 = tpu.matmul %1, %2, %cst {dimension_numbers = #tpu.dot_dimension_numbers<[1], [0], [0], [1], [0, 0, 1, 1], [], []>} : vector<64x32xbf16>, vector<32x128xbf16>, vector<64x128xf32> -> vector<64x128xf32>
    %5 = vector.broadcast %3 : vector<1x128xf32> to vector<64x128xf32>
    %6 = arith.addf %4, %5 : vector<64x128xf32>
    %7 = arith.truncf %6 : vector<64x128xf32> to vector<64x128xbf16>
    %8 = arith.negf %7 : vector<64x128xbf16>
    %9 = math.exp %8 : vector<64x128xbf16>
    %cst_5 = arith.constant 1.000000e+00 : bf16
    %10 = vector.broadcast %cst_5 : bf16 to vector<64x128xbf16>
    %11 = arith.addf %10, %9 : vector<64x128xbf16>
    %12 = arith.divf %10, %11 : vector<64x128xbf16>
    %13 = arith.mulf %7, %12 : vector<64x128xbf16>
    %c0_6 = arith.constant 0 : index
    %c0_7 = arith.constant 0 : index
    %14 = vector.load %arg4[%c0_6, %c0_7] : memref<128x128xbf16, #tpu.memory_space<vmem>>, vector<128x128xbf16>
    %c0_8 = arith.constant 0 : index
    %c0_9 = arith.constant 0 : index
    %15 = vector.load %arg5[%c0_8, %c0_9] : memref<1x128xf32, #tpu.memory_space<vmem>>, vector<1x128xf32>
    %cst_10 = arith.constant dense<0.000000e+00> : vector<64x128xf32>
    %16 = tpu.matmul %13, %14, %cst_10 {dimension_numbers = #tpu.dot_dimension_numbers<[1], [0], [0], [1], [0, 0, 1, 1], [], []>} : vector<64x128xbf16>, vector<128x128xbf16>, vector<64x128xf32> -> vector<64x128xf32>
    %17 = vector.broadcast %15 : vector<1x128xf32> to vector<64x128xf32>
    %18 = arith.addf %16, %17 : vector<64x128xf32>
    %19 = arith.truncf %18 : vector<64x128xf32> to vector<64x128xbf16>
    %20 = arith.negf %19 : vector<64x128xbf16>
    %21 = math.exp %20 : vector<64x128xbf16>
    %cst_11 = arith.constant 1.000000e+00 : bf16
    %22 = vector.broadcast %cst_11 : bf16 to vector<64x128xbf16>
    %23 = arith.addf %22, %21 : vector<64x128xbf16>
    %24 = arith.divf %22, %23 : vector<64x128xbf16>
    %25 = arith.mulf %19, %24 : vector<64x128xbf16>
    %c0_12 = arith.constant 0 : index
    %c0_13 = arith.constant 0 : index
    %26 = vector.load %arg6[%c0_12, %c0_13] : memref<128x16xbf16, #tpu.memory_space<vmem>>, vector<128x16xbf16>
    %c0_14 = arith.constant 0 : index
    %c0_15 = arith.constant 0 : index
    %27 = vector.load %arg7[%c0_14, %c0_15] : memref<1x16xf32, #tpu.memory_space<vmem>>, vector<1x16xf32>
    %cst_16 = arith.constant dense<0.000000e+00> : vector<64x16xf32>
    %28 = tpu.matmul %25, %26, %cst_16 {dimension_numbers = #tpu.dot_dimension_numbers<[1], [0], [0], [1], [0, 0, 1, 1], [], []>} : vector<64x128xbf16>, vector<128x16xbf16>, vector<64x16xf32> -> vector<64x16xf32>
    %29 = vector.broadcast %27 : vector<1x16xf32> to vector<64x16xf32>
    %30 = arith.addf %28, %29 : vector<64x16xf32>
    %c0_17 = arith.constant 0 : index
    %c0_18 = arith.constant 0 : index
    %31 = vector.load %arg8[%c0_17, %c0_18] : memref<64x16xf32, #tpu.memory_space<vmem>>, vector<64x16xf32>
    tpu.vector_store %arg8[%c0_17, %c0_18], %30 {strides = array<i32>} : memref<64x16xf32, #tpu.memory_space<vmem>>, vector<64x16xf32>,
    return
  }
  func.func @transform_0(%arg0: i32) -> (i32, i32) {
    %c0_i32 = arith.constant 0 : i32
    %c0_i32_0 = arith.constant 0 : i32
    return %arg0, %c0_i32 : i32, i32
  }
  func.func @transform_1(%arg0: i32) -> (i32, i32) {
    %c0_i32 = arith.constant 0 : i32
    %c0_i32_0 = arith.constant 0 : i32
    %c0_i32_1 = arith.constant 0 : i32
    return %c0_i32, %c0_i32_0 : i32, i32
  }
  func.func @transform_2(%arg0: i32) -> (i32, i32) {
    %c0_i32 = arith.constant 0 : i32
    %c0_i32_0 = arith.constant 0 : i32
    %c0_i32_1 = arith.constant 0 : i32
    return %c0_i32, %c0_i32_0 : i32, i32
  }
  func.func @transform_3(%arg0: i32) -> (i32, i32) {
    %c0_i32 = arith.constant 0 : i32
    %c0_i32_0 = arith.constant 0 : i32
    %c0_i32_1 = arith.constant 0 : i32
    return %c0_i32, %c0_i32_0 : i32, i32
  }
  func.func @transform_4(%arg0: i32) -> (i32, i32) {
    %c0_i32 = arith.constant 0 : i32
    %c0_i32_0 = arith.constant 0 : i32
    %c0_i32_1 = arith.constant 0 : i32
    return %c0_i32, %c0_i32_0 : i32, i32
  }
  func.func @transform_5(%arg0: i32) -> (i32, i32) {
    %c0_i32 = arith.constant 0 : i32
    %c0_i32_0 = arith.constant 0 : i32
    %c0_i32_1 = arith.constant 0 : i32
    return %c0_i32, %c0_i32_0 : i32, i32
  }
  func.func @transform_6(%arg0: i32) -> (i32, i32) {
    %c0_i32 = arith.constant 0 : i32
    %c0_i32_0 = arith.constant 0 : i32
    %c0_i32_1 = arith.constant 0 : i32
    return %c0_i32, %c0_i32_0 : i32, i32
  }
  func.func @transform_7(%arg0: i32) -> (i32, i32) {
    %c0_i32 = arith.constant 0 : i32
    %c0_i32_0 = arith.constant 0 : i32
    return %arg0, %c0_i32 : i32, i32
  }
}

module attributes {stable_mosaic.version = 11 : i64} {
  func.func @kernel(%arg0: i32, %arg1: memref<64x32xf32, #tpu.memory_space<vmem>>, %arg2: memref<32x128xbf16, #tpu.memory_space<vmem>>, %arg3: memref<1x128xf32, #tpu.memory_space<vmem>>, %arg4: memref<128x128xbf16, #tpu.memory_space<vmem>>, %arg5: memref<1x128xf32, #tpu.memory_space<vmem>>, %arg6: memref<128x16xbf16, #tpu.memory_space<vmem>>, %arg7: memref<1x16xf32, #tpu.memory_space<vmem>>, %arg8: memref<64x16xf32, #tpu.memory_space<vmem>>) attributes {dimension_semantics = [#tpu.dimension_semantics<parallel>], iteration_bounds = array<i64: 2>, scalar_prefetch = 0 : i64, scratch_operands = 0 : i64, tpu.core_type = #tpu.core_type<tc>, window_params = [{transform_indices = @transform_0, window_bounds = array<i64: 64, 32>}, {pipeline_mode = #tpu.pipeline_mode<synchronous>, transform_indices = @transform_1, window_bounds = array<i64: 32, 128>}, {pipeline_mode = #tpu.pipeline_mode<synchronous>, transform_indices = @transform_2, window_bounds = array<i64: 1, 128>}, {pipeline_mode = #tpu.pipeline_mode<synchronous>, transform_indices = @transform_3, window_bounds = array<i64: 128, 128>}, {pipeline_mode = #tpu.pipeline_mode<synchronous>, transform_indices = @transform_4, window_bounds = array<i64: 1, 128>}, {pipeline_mode = #tpu.pipeline_mode<synchronous>, transform_indices = @transform_5, window_bounds = array<i64: 128, 16>}, {pipeline_mode = #tpu.pipeline_mode<synchronous>, transform_indices = @transform_6, window_bounds = array<i64: 1, 16>}, {transform_indices = @transform_7, window_bounds = array<i64: 64, 16>}]} {
    %c0 = arith.constant 0 : index
    %c0_0 = arith.constant 0 : index
    %0 = vector.load %arg1[%c0, %c0_0] : memref<64x32xf32, #tpu.memory_space<vmem>>, vector<64x32xf32>
    %1 = arith.truncf %0 : vector<64x32xf32> to vector<64x32xbf16>
    %c0_1 = arith.constant 0 : index
    %c0_2 = arith.constant 0 : index
    %2 = vector.load %arg2[%c0_1, %c0_2] : memref<32x128xbf16, #tpu.memory_space<vmem>>, vector<32x128xbf16>
    %c0_3 = arith.constant 0 : index
    %c0_4 = arith.constant 0 : index
    %3 = vector.load %arg3[%c0_3, %c0_4] : memref<1x128xf32, #tpu.memory_space<vmem>>, vector<1x128xf32>
    %cst = arith.constant dense<0.000000e+00> : vector<64x128xf32>
    %4 = tpu.matmul %1, %2, %cst {dimension_numbers = #tpu.dot_dimension_numbers<[1], [0], [0], [1], [0, 0, 1, 1], [], []>} : vector<64x32xbf16>, vector<32x128xbf16>, vector<64x128xf32> -> vector<64x128xf32>
    %5 = vector.broadcast %3 : vector<1x128xf32> to vector<64x128xf32>
    %6 = arith.addf %4, %5 : vector<64x128xf32>
    %7 = arith.truncf %6 : vector<64x128xf32> to vector<64x128xbf16>
    %8 = arith.negf %7 : vector<64x128xbf16>
    %9 = math.exp %8 : vector<64x128xbf16>
    %cst_5 = arith.constant 1.000000e+00 : bf16
    %10 = vector.broadcast %cst_5 : bf16 to vector<64x128xbf16>
    %11 = arith.addf %10, %9 : vector<64x128xbf16>
    %12 = arith.divf %10, %11 : vector<64x128xbf16>
    %13 = arith.mulf %7, %12 : vector<64x128xbf16>
    %c0_6 = arith.constant 0 : index
    %c0_7 = arith.constant 0 : index
    %14 = vector.load %arg4[%c0_6, %c0_7] : memref<128x128xbf16, #tpu.memory_space<vmem>>, vector<128x128xbf16>
    %c0_8 = arith.constant 0 : index
    %c0_9 = arith.constant 0 : index
    %15 = vector.load %arg5[%c0_8, %c0_9] : memref<1x128xf32, #tpu.memory_space<vmem>>, vector<1x128xf32>
    %cst_10 = arith.constant dense<0.000000e+00> : vector<64x128xf32>
    %16 = tpu.matmul %13, %14, %cst_10 {dimension_numbers = #tpu.dot_dimension_numbers<[1], [0], [0], [1], [0, 0, 1, 1], [], []>} : vector<64x128xbf16>, vector<128x128xbf16>, vector<64x128xf32> -> vector<64x128xf32>
    %17 = vector.broadcast %15 : vector<1x128xf32> to vector<64x128xf32>
    %18 = arith.addf %16, %17 : vector<64x128xf32>
    %19 = arith.truncf %18 : vector<64x128xf32> to vector<64x128xbf16>
    %20 = arith.negf %19 : vector<64x128xbf16>
    %21 = math.exp %20 : vector<64x128xbf16>
    %cst_11 = arith.constant 1.000000e+00 : bf16
    %22 = vector.broadcast %cst_11 : bf16 to vector<64x128xbf16>
    %23 = arith.addf %22, %21 : vector<64x128xbf16>
    %24 = arith.divf %22, %23 : vector<64x128xbf16>
    %25 = arith.mulf %19, %24 : vector<64x128xbf16>
    %c0_12 = arith.constant 0 : index
    %c0_13 = arith.constant 0 : index
    %26 = vector.load %arg6[%c0_12, %c0_13] : memref<128x16xbf16, #tpu.memory_space<vmem>>, vector<128x16xbf16>
    %c0_14 = arith.constant 0 : index
    %c0_15 = arith.constant 0 : index
    %27 = vector.load %arg7[%c0_14, %c0_15] : memref<1x16xf32, #tpu.memory_space<vmem>>, vector<1x16xf32>
    %cst_16 = arith.constant dense<0.000000e+00> : vector<64x16xf32>
    %28 = tpu.matmul %25, %26, %cst_16 {dimension_numbers = #tpu.dot_dimension_numbers<[1], [0], [0], [1], [0, 0, 1, 1], [], []>} : vector<64x128xbf16>, vector<128x16xbf16>, vector<64x16xf32> -> vector<64x16xf32>
    %29 = vector.broadcast %27 : vector<1x16xf32> to vector<64x16xf32>
    %30 = arith.addf %28, %29 : vector<64x16xf32>
    %c0_17 = arith.constant 0 : index
    %c0_18 = arith.constant 0 : index
    %31 = vector.load %arg8[%c0_17, %c0_18] : memref<64x16xf32, #tpu.memory_space<vmem>>, vector<64x16xf32>
    tpu.vector_store %arg8[%c0_17, %c0_18], %30 {strides = array<i32>} : memref<64x16xf32, #tpu.memory_space<vmem>>, vector<64x16xf32>,
    return
  }
  func.func @transform_0(%arg0: i32) -> (i32, i32) {
    %c0_i32 = arith.constant 0 : i32
    %c0_i32_0 = arith.constant 0 : i32
    return %arg0, %c0_i32 : i32, i32
  }
  func.func @transform_1(%arg0: i32) -> (i32, i32) {
    %c0_i32 = arith.constant 0 : i32
    %c0_i32_0 = arith.constant 0 : i32
    %c0_i32_1 = arith.constant 0 : i32
    return %c0_i32, %c0_i32_0 : i32, i32
  }
  func.func @transform_2(%arg0: i32) -> (i32, i32) {
    %c0_i32 = arith.constant 0 : i32
    %c0_i32_0 = arith.constant 0 : i32
    %c0_i32_1 = arith.constant 0 : i32
    return %c0_i32, %c0_i32_0 : i32, i32
  }
  func.func @transform_3(%arg0: i32) -> (i32, i32) {
    %c0_i32 = arith.constant 0 : i32
    %c0_i32_0 = arith.constant 0 : i32
    %c0_i32_1 = arith.constant 0 : i32
    return %c0_i32, %c0_i32_0 : i32, i32
  }
  func.func @transform_4(%arg0: i32) -> (i32, i32) {
    %c0_i32 = arith.constant 0 : i32
    %c0_i32_0 = arith.constant 0 : i32
    %c0_i32_1 = arith.constant 0 : i32
    return %c0_i32, %c0_i32_0 : i32, i32
  }
  func.func @transform_5(%arg0: i32) -> (i32, i32) {
    %c0_i32 = arith.constant 0 : i32
    %c0_i32_0 = arith.constant 0 : i32
    %c0_i32_1 = arith.constant 0 : i32
    return %c0_i32, %c0_i32_0 : i32, i32
  }
  func.func @transform_6(%arg0: i32) -> (i32, i32) {
    %c0_i32 = arith.constant 0 : i32
    %c0_i32_0 = arith.constant 0 : i32
    %c0_i32_1 = arith.constant 0 : i32
    return %c0_i32, %c0_i32_0 : i32, i32
  }
  func.func @transform_7(%arg0: i32) -> (i32, i32) {
    %c0_i32 = arith.constant 0 : i32
    %c0_i32_0 = arith.constant 0 : i32
    return %arg0, %c0_i32 : i32, i32
  }
}

</mosaic_0001>

<llo_original>
// kernel: tpu_custom_call.1
$region0: #{tpu_custom_call.1}
  #allocation0 [shape = 'u32[]', space=smem, size = 0x4, offset = 0x4, fixed_abs, tag = 'smem constant byte address 0x4 - core index']
  #allocation1 [shape = 'u32[72,128]{1,0:T(1,128)}', space=vmem, size = 0x9000, scoped, tag = 'internal scratch']
  %s0 = inlined_call_operand.vmem [shape: f32[128,32], index: 0, kind: input, shape index: {}]
  %s1 = inlined_call_operand.vmem [shape: bf16[32,128], index: 1, kind: input, shape index: {}]
  %s2 = inlined_call_operand.vmem [shape: f32[1,128], index: 2, kind: input, shape index: {}]
  %s3 = inlined_call_operand.vmem [shape: bf16[128,128], index: 3, kind: input, shape index: {}]
  %s4 = inlined_call_operand.vmem [shape: f32[1,128], index: 4, kind: input, shape index: {}]
  %s5 = inlined_call_operand.vmem [shape: bf16[128,16], index: 5, kind: input, shape index: {}]
  %s6 = inlined_call_operand.vmem [shape: f32[1,16], index: 6, kind: input, shape index: {}]
  %s7 = inlined_call_operand.vmem [shape: f32[128,16], index: 7, kind: output, shape index: {}]
  %s8 = sld [smem:[#allocation0]]
  $region61: #{tpu_custom_call.1} parent=0
    _
  %s10 = ssub.s32 1, %s8
  %s11 = scalar_select 0, %s10, %s8
  loop: start=0, step=1, limit=4
  $region2: #{tpu_custom_call.1} parent=0 // loop_pre_header
    _
  $region3: #{tpu_custom_call.1} parent=0 // loop_header
    %s13 = sphi 0, %s17
    %p14 = scmp.ge.s32.totalorder %s13, 4
    %s23 = sphi 0, %s25
    %s26 = sphi 0, %s23
    %s27 = sphi 0, %s26
    %s43 = sphi 0, %s27
    %s47 = sphi 0, %s47
    %s49 = sphi 0, %s47
    %s50 = sphi 0, %s49
    %s64 = sphi 0, %s50
    %s68 = sphi 0, %s68
    %s70 = sphi 0, %s68
    %s71 = sphi 0, %s70
    %s85 = sphi 0, %s71
    %s89 = sphi 0, %s89
    %s91 = sphi 0, %s89
    %s92 = sphi 0, %s91
    %s106 = sphi 0, %s92
    %s110 = sphi 0, %s110
    %s112 = sphi 0, %s110
    %s113 = sphi 0, %s112
    %s127 = sphi 0, %s113
    %s131 = sphi 0, %s131
    %s133 = sphi 0, %s131
    %s134 = sphi 0, %s133
    %s148 = sphi 0, %s134
    %s152 = sphi 0, %s152
    %s154 = sphi 0, %s152
    %s155 = sphi 0, %s154
    %s169 = sphi 0, %s155
    %s175 = sphi 0, %s177
    %s178 = sphi 0, %s175
    %s179 = sphi 0, %s178
    %s195 = sphi 0, %s179
  $region4: #{tpu_custom_call.1} parent=0 // loop_header_branch
    %16 = sbr.rel (%p14) target = $region8
  $region5: #{tpu_custom_call.1} parent=0 // loop_body
    %s18 = ssub.s32 %s13, 1
    %s19 = ssub.s32 %s13, 2
    %s20 = sadd.s32 %s13, 1
    %s21 = ssub.s32 %s13, %s20
    %p22 = scmp.eq.s32.totalorder %s21, 0
    %s24 = sadd.s32 %s23, 1
    %s25 = scalar_select %p22, %s23, %s24
    %p28 = pneg %p22
    %p29 = scmp.eq.s32.totalorder %s13, 1
    %p30 = por %p28, %p29
    %p31 = scmp.ne.s32.totalorder %s23, %s26
    %p32 = scmp.eq.s32.totalorder %s13, 0
    %p33 = por %p31, %p32
    %p34 = scmp.ne.s32.totalorder %s23, %s26
    %p35 = scmp.eq.s32.totalorder %s18, 1
    %p36 = por %p34, %p35
    %p37 = scmp.ne.s32.totalorder %s26, %s27
    %p38 = scmp.eq.s32.totalorder %s18, 0
    %p39 = por %p37, %p38
    %p40 = scmp.ne.s32.totalorder %s26, %s27
    %p41 = scmp.eq.s32.totalorder %s19, 1
    %p42 = por %p40, %p41
    %p44 = scmp.ne.s32.totalorder %s27, %s43
    %p45 = scmp.eq.s32.totalorder %s19, 0
    %p46 = por %p44, %p45
    %s48 = sadd.s32 %s47, 1
    %p51 = scmp.eq.s32.totalorder %s13, 1
    %p52 = scmp.ne.s32.totalorder %s47, %s49
    %p53 = scmp.eq.s32.totalorder %s13, 0
    %p54 = por %p52, %p53
    %p55 = scmp.ne.s32.totalorder %s47, %s49
    %p56 = scmp.eq.s32.totalorder %s18, 1
    %p57 = por %p55, %p56
    %p58 = scmp.ne.s32.totalorder %s49, %s50
    %p59 = scmp.eq.s32.totalorder %s18, 0
    %p60 = por %p58, %p59
    %p61 = scmp.ne.s32.totalorder %s49, %s50
    %p62 = scmp.eq.s32.totalorder %s19, 1
    %p63 = por %p61, %p62
    %p65 = scmp.ne.s32.totalorder %s50, %s64
    %p66 = scmp.eq.s32.totalorder %s19, 0
    %p67 = por %p65, %p66
    %s69 = sadd.s32 %s68, 1
    %p72 = scmp.eq.s32.totalorder %s13, 1
    %p73 = scmp.ne.s32.totalorder %s68, %s70
    %p74 = scmp.eq.s32.totalorder %s13, 0
    %p75 = por %p73, %p74
    %p76 = scmp.ne.s32.totalorder %s68, %s70
    %p77 = scmp.eq.s32.totalorder %s18, 1
    %p78 = por %p76, %p77
    %p79 = scmp.ne.s32.totalorder %s70, %s71
    %p80 = scmp.eq.s32.totalorder %s18, 0
    %p81 = por %p79, %p80
    %p82 = scmp.ne.s32.totalorder %s70, %s71
    %p83 = scmp.eq.s32.totalorder %s19, 1
    %p84 = por %p82, %p83
    %p86 = scmp.ne.s32.totalorder %s71, %s85
    %p87 = scmp.eq.s32.totalorder %s19, 0
    %p88 = por %p86, %p87
    %s90 = sadd.s32 %s89, 1
    %p93 = scmp.eq.s32.totalorder %s13, 1
    %p94 = scmp.ne.s32.totalorder %s89, %s91
    %p95 = scmp.eq.s32.totalorder %s13, 0
    %p96 = por %p94, %p95
    %p97 = scmp.ne.s32.totalorder %s89, %s91
    %p98 = scmp.eq.s32.totalorder %s18, 1
    %p99 = por %p97, %p98
    %p100 = scmp.ne.s32.totalorder %s91, %s92
    %p101 = scmp.eq.s32.totalorder %s18, 0
    %p102 = por %p100, %p101
    %p103 = scmp.ne.s32.totalorder %s91, %s92
    %p104 = scmp.eq.s32.totalorder %s19, 1
    %p105 = por %p103, %p104
    %p107 = scmp.ne.s32.totalorder %s92, %s106
    %p108 = scmp.eq.s32.totalorder %s19, 0
    %p109 = por %p107, %p108
    %s111 = sadd.s32 %s110, 1
    %p114 = scmp.eq.s32.totalorder %s13, 1
    %p115 = scmp.ne.s32.totalorder %s110, %s112
    %p116 = scmp.eq.s32.totalorder %s13, 0
    %p117 = por %p115, %p116
    %p118 = scmp.ne.s32.totalorder %s110, %s112
    %p119 = scmp.eq.s32.totalorder %s18, 1
    %p120 = por %p118, %p119
    %p121 = scmp.ne.s32.totalorder %s112, %s113
    %p122 = scmp.eq.s32.totalorder %s18, 0
    %p123 = por %p121, %p122
    %p124 = scmp.ne.s32.totalorder %s112, %s113
    %p125 = scmp.eq.s32.totalorder %s19, 1
    %p126 = por %p124, %p125
    %p128 = scmp.ne.s32.totalorder %s113, %s127
    %p129 = scmp.eq.s32.totalorder %s19, 0
    %p130 = por %p128, %p129
    %s132 = sadd.s32 %s131, 1
    %p135 = scmp.eq.s32.totalorder %s13, 1
    %p136 = scmp.ne.s32.totalorder %s131, %s133
    %p137 = scmp.eq.s32.totalorder %s13, 0
    %p138 = por %p136, %p137
    %p139 = scmp.ne.s32.totalorder %s131, %s133
    %p140 = scmp.eq.s32.totalorder %s18, 1
    %p141 = por %p139, %p140
    %p142 = scmp.ne.s32.totalorder %s133, %s134
    %p143 = scmp.eq.s32.totalorder %s18, 0
    %p144 = por %p142, %p143
    %p145 = scmp.ne.s32.totalorder %s133, %s134
    %p146 = scmp.eq.s32.totalorder %s19, 1
    %p147 = por %p145, %p146
    %p149 = scmp.ne.s32.totalorder %s134, %s148
    %p150 = scmp.eq.s32.totalorder %s19, 0
    %p151 = por %p149, %p150
    %s153 = sadd.s32 %s152, 1
    %p156 = scmp.eq.s32.totalorder %s13, 1
    %p157 = scmp.ne.s32.totalorder %s152, %s154
    %p158 = scmp.eq.s32.totalorder %s13, 0
    %p159 = por %p157, %p158
    %p160 = scmp.ne.s32.totalorder %s152, %s154
    %p161 = scmp.eq.s32.totalorder %s18, 1
    %p162 = por %p160, %p161
    %p163 = scmp.ne.s32.totalorder %s154, %s155
    %p164 = scmp.eq.s32.totalorder %s18, 0
    %p165 = por %p163, %p164
    %p166 = scmp.ne.s32.totalorder %s154, %s155
    %p167 = scmp.eq.s32.totalorder %s19, 1
    %p168 = por %p166, %p167
    %p170 = scmp.ne.s32.totalorder %s155, %s169
    %p171 = scmp.eq.s32.totalorder %s19, 0
    %p172 = por %p170, %p171
    %s173 = ssub.s32 %s13, %s20
    %p174 = scmp.eq.s32.totalorder %s173, 0
    %s176 = sadd.s32 %s175, 1
    %s177 = scalar_select %p174, %s175, %s176
    %p180 = pneg %p174
    %p181 = scmp.eq.s32.totalorder %s13, 1
    %p182 = por %p180, %p181
    %p183 = scmp.ne.s32.totalorder %s175, %s178
    %p184 = scmp.eq.s32.totalorder %s13, 0
    %p185 = por %p183, %p184
    %p186 = scmp.ne.s32.totalorder %s175, %s178
    %p187 = scmp.eq.s32.totalorder %s18, 1
    %p188 = por %p186, %p187
    %p189 = scmp.ne.s32.totalorder %s178, %s179
    %p190 = scmp.eq.s32.totalorder %s18, 0
    %p191 = por %p189, %p190
    %p192 = scmp.ne.s32.totalorder %s178, %s179
    %p193 = scmp.eq.s32.totalorder %s19, 1
    %p194 = por %p192, %p193
    %p196 = scmp.ne.s32.totalorder %s179, %s195
    %p197 = scmp.eq.s32.totalorder %s19, 0
    %p198 = por %p196, %p197
    %p199 = scmp.le.s32.totalorder 1, %s13
    %p200 = scmp.lt.s32.totalorder %s13, 3
    %p201 = pnand %p199, %p200
    %p202 = pneg %p201
    // Predicated region
    $region9: #{tpu_custom_call.1} parent=5 // pred_check
      _
    $region10: #{tpu_custom_call.1} parent=5 // pred_check_branch
      %204 = sbr.rel (%p201) target = $region12
    $region11: #{tpu_custom_call.1} parent=5 // pred_region
      %s205 = ssub.s32 %s13, 1
      // Predicated region
      $region13: #{tpu_custom_call.1} parent=11 // pred_check
        %p206 = pneg %p60
      $region14: #{tpu_custom_call.1} parent=11 // pred_check_branch
        %208 = sbr.rel (%p206) target = $region16
      $region15: #{tpu_custom_call.1} parent=11 // pred_region
        _
      $region16: #{tpu_custom_call.1} parent=11 // pred_fallthru
        _
      // Predicated region
      $region17: #{tpu_custom_call.1} parent=11 // pred_check
        %p209 = pneg %p81
      $region18: #{tpu_custom_call.1} parent=11 // pred_check_branch
        %211 = sbr.rel (%p209) target = $region20
      $region19: #{tpu_custom_call.1} parent=11 // pred_region
        _
      $region20: #{tpu_custom_call.1} parent=11 // pred_fallthru
        _
      // Predicated region
      $region21: #{tpu_custom_call.1} parent=11 // pred_check
        %p212 = pneg %p102
      $region22: #{tpu_custom_call.1} parent=11 // pred_check_branch
        %214 = sbr.rel (%p212) target = $region24
      $region23: #{tpu_custom_call.1} parent=11 // pred_region
        _
      $region24: #{tpu_custom_call.1} parent=11 // pred_fallthru
        _
      // Predicated region
      $region25: #{tpu_custom_call.1} parent=11 // pred_check
        %p215 = pneg %p123
      $region26: #{tpu_custom_call.1} parent=11 // pred_check_branch
        %217 = sbr.rel (%p215) target = $region28
      $region27: #{tpu_custom_call.1} parent=11 // pred_region
        _
      $region28: #{tpu_custom_call.1} parent=11 // pred_fallthru
        _
      // Predicated region
      $region29: #{tpu_custom_call.1} parent=11 // pred_check
        %p218 = pneg %p144
      $region30: #{tpu_custom_call.1} parent=11 // pred_check_branch
        %220 = sbr.rel (%p218) target = $region32
      $region31: #{tpu_custom_call.1} parent=11 // pred_region
        _
      $region32: #{tpu_custom_call.1} parent=11 // pred_fallthru
        _
      // Predicated region
      $region33: #{tpu_custom_call.1} parent=11 // pred_check
        %p221 = pneg %p165
      $region34: #{tpu_custom_call.1} parent=11 // pred_check_branch
        %223 = sbr.rel (%p221) target = $region36
      $region35: #{tpu_custom_call.1} parent=11 // pred_region
        _
      $region36: #{tpu_custom_call.1} parent=11 // pred_fallthru
        _
    $region12: #{tpu_custom_call.1} parent=5 // pred_fallthru
      _
    %p224 = scmp.lt.s32.totalorder %s13, 2
    // Predicated region
    $region37: #{tpu_custom_call.1} parent=5 // pred_check
      %p225 = pneg %p224
    $region38: #{tpu_custom_call.1} parent=5 // pred_check_branch
      %227 = sbr.rel (%p225) target = $region40
    $region39: #{tpu_custom_call.1} parent=5 // pred_region
      // Predicated region
      $region41: #{tpu_custom_call.1} parent=39 // pred_check
        %p228 = pneg %p33
      $region42: #{tpu_custom_call.1} parent=39 // pred_check_branch
        %230 = sbr.rel (%p228) target = $region44
      $region43: #{tpu_custom_call.1} parent=39 // pred_region
        %s231 = smul.u32 8, %s13
        %p232 = scmp.lt.s32.totalorder %s231, 15
        %s233 = scalar_select %p232, %s231, 15
        %s234 = smul.addr %s233, 8
        %s235 = scalar_lea.vmem %s0, %s234
        %s236 = smul.u32 8, %s13
      $region44: #{tpu_custom_call.1} parent=39 // pred_fallthru
        _
    $region40: #{tpu_custom_call.1} parent=5 // pred_fallthru
      _
    %p237 = scmp.le.s32.totalorder 1, %s13
    %p238 = scmp.lt.s32.totalorder %s13, 3
    %p239 = pnand %p237, %p238
    %p240 = pneg %p239
    // Predicated region
    $region45: #{tpu_custom_call.1} parent=5 // pred_check
      _
    $region46: #{tpu_custom_call.1} parent=5 // pred_check_branch
      %242 = sbr.rel (%p239) target = $region48
    $region47: #{tpu_custom_call.1} parent=5 // pred_region
      %s243 = ssub.s32 %s13, 1
      %s244 = smul.u32 8, %s18
      %p245 = scmp.lt.s32.totalorder %s244, 15
      %s246 = scalar_select %p245, %s244, 15
      %s247 = smul.addr %s246, 8
      %s248 = scalar_lea.vmem %s0, %s247
      %p249 = pneg %p39
      %p250 = pneg %p36
      %p251 = pneg %p60
      %p252 = pneg %p57
      %p253 = pneg %p81
      %p254 = pneg %p78
      %p255 = pneg %p102
      %p256 = pneg %p99
      %p257 = pneg %p123
      %p258 = pneg %p120
      %p259 = pneg %p144
      %p260 = pneg %p141
      %p261 = pneg %p165
      %p262 = pneg %p162
      %p263 = pneg %p191
      %p264 = pneg %p188
      %s265 = smul.u32 8, %s18
      %p266 = scmp.lt.s32.totalorder %s265, 15
      %s267 = scalar_select %p266, %s265, 15
      %s268 = smul.addr %s267, 8
      %s269 = scalar_lea.vmem %s7, %s268
      %s270 = smul.u32 8, %s18
      %p271 = scmp.lt.s32.totalorder %s270, 15
      %s272 = scalar_select %p271, %s270, 15
      %s273 = smul.addr %s272, 8
      %s274 = scalar_lea.vmem %s0, %s273
      %s275 = smul.u32 8, %s18
      %s276 = smul.u32 8, %s18
      %p277 = scmp.lt.s32.totalorder %s276, 15
      %s278 = scalar_select %p277, %s276, 15
      %s279 = smul.addr %s278, 8
      %s280 = scalar_lea.vmem %s7, %s279
      %s281 = smul.u32 8, %s18
      %v284 = vld [vmem:[%s274] sm:$0xff]
      %v285 = vld [vmem:[%s274 + $0x8] sm:$0xff]
      %v286 = vld [vmem:[%s274 + $0x10] sm:$0xff]
      %v287 = vld [vmem:[%s274 + $0x18] sm:$0xff]
      %v288 = vld [vmem:[%s274 + $0x20] sm:$0xff]
      %v289 = vld [vmem:[%s274 + $0x28] sm:$0xff]
      %v290 = vld [vmem:[%s274 + $0x30] sm:$0xff]
      %v291 = vld [vmem:[%s274 + $0x38] sm:$0xff]
      %v292 = vpack.c.bf16 %v285, %v284
      %v293 = vpack.c.bf16 %v287, %v286
      %v294 = vpack.c.bf16 %v289, %v288
      %v295 = vpack.c.bf16 %v291, %v290
      %v296 = vld [vmem:[%s1] sm:$0xf]
      %v297 = vld [vmem:[%s1 + $0x4] sm:$0xf]
      %v298 = vld [vmem:[%s1 + $0x8] sm:$0xf]
      %v299 = vld [vmem:[%s1 + $0xc] sm:$0xf]
      %v300 = vld [vmem:[%s2] sm:$0x1]
      %v302 = vperm.slane %v300, 0
      %v308 = vunpack.c.l.b16 %v296
      %v309 = vunpack.c.l.b16 %v297
      %v310 = vunpack.c.l.b16 %v298
      %v311 = vunpack.c.l.b16 %v299
      %v312 = vpack.c.b16 %v309, %v308
      %v313 = vpack.c.b16 %v311, %v310
      %vm316 = vcmask 261120
      %v318 = vsel %vm316, %v292, 0
      %v321 = vsel %vm316, %v293, 0
      %v324 = vsel %vm316, %v294, 0
      %v327 = vsel %vm316, %v295, 0
      %329 = vmatpush.bf16.msra.mxu0 0
      %330 = vmatpush.bf16.msra.mxu0 0
      %331 = vmatpush.bf16.msra.mxu0 0
      %332 = vmatpush.bf16.msra.mxu0 0
      %333 = vmatpush.bf16.msra.mxu0 0
      %334 = vmatpush.bf16.msra.mxu0 0
      %335 = vmatpush.bf16.msra.mxu0 %v313
      %336 = vmatpush.bf16.msra.mxu0 %v312
      %337 = vmatmul.bf16.gmra.mxu0 %v318
      %v338 = vpop.f32.mrf.mxu0
      %v339 = vadd.f32 %v302, %v338
      %v340 = vpop.f32.mrf.mxu0
      %v341 = vadd.f32 %v302, %v340
      %342 = vmatmul.bf16.gmra.mxu0 %v321
      %v343 = vpop.f32.mrf.mxu0
      %v344 = vadd.f32 %v302, %v343
      %v345 = vpop.f32.mrf.mxu0
      %v346 = vadd.f32 %v302, %v345
      %347 = vmatmul.bf16.gmra.mxu0 %v324
      %v348 = vpop.f32.mrf.mxu0
      %v349 = vadd.f32 %v302, %v348
      %v350 = vpop.f32.mrf.mxu0
      %v351 = vadd.f32 %v302, %v350
      %352 = vmatmul.bf16.gmra.mxu0 %v327
      %v353 = vpop.f32.mrf.mxu0
      %v354 = vadd.f32 %v302, %v353
      %v355 = vpop.f32.mrf.mxu0
      %v356 = vadd.f32 %v302, %v355
      %357 = vdwg.mxu0
      %v358 = vpack.c.bf16 %v339, %v339
      %v359 = vpack.c.bf16 %v341, %v341
      %v360 = vpack.c.bf16 %v344, %v344
      %v361 = vpack.c.bf16 %v346, %v346
      %v362 = vpack.c.bf16 %v349, %v349
      %v363 = vpack.c.bf16 %v351, %v351
      %v364 = vpack.c.bf16 %v354, %v354
      %v365 = vpack.c.bf16 %v356, %v356
      %v366 = vxor.u32 %v358, 2147516416
      %v367 = vxor.u32 %v359, 2147516416
      %v368 = vxor.u32 %v360, 2147516416
      %v369 = vxor.u32 %v361, 2147516416
      %v370 = vxor.u32 %v362, 2147516416
      %v371 = vxor.u32 %v363, 2147516416
      %v372 = vxor.u32 %v364, 2147516416
      %v373 = vxor.u32 %v365, 2147516416
      %v374 = vunpack.c.l.bf16 %v366
      %v375 = vunpack.c.l.bf16 %v367
      %v376 = vunpack.c.l.bf16 %v368
      %v377 = vunpack.c.l.bf16 %v369
      %v378 = vunpack.c.l.bf16 %v370
      %v379 = vunpack.c.l.bf16 %v371
      %v380 = vunpack.c.l.bf16 %v372
      %v381 = vunpack.c.l.bf16 %v373
      %v382 = vmul.f32 %v374, 1.442695
      %v383 = vpow.pop %v382
      %v384 = vmul.f32 %v375, 1.442695
      %v385 = vpow.pop %v384
      %v386 = vmul.f32 %v376, 1.442695
      %v387 = vpow.pop %v386
      %v388 = vmul.f32 %v377, 1.442695
      %v389 = vpow.pop %v388
      %v390 = vmul.f32 %v378, 1.442695
      %v391 = vpow.pop %v390
      %v392 = vmul.f32 %v379, 1.442695
      %v393 = vpow.pop %v392
      %v394 = vmul.f32 %v380, 1.442695
      %v395 = vpow.pop %v394
      %v396 = vmul.f32 %v381, 1.442695
      %v397 = vpow.pop %v396
      %v398 = vpack.c.bf16 %v383, %v383
      %v399 = vpack.c.bf16 %v385, %v385
      %v400 = vpack.c.bf16 %v387, %v387
      %v401 = vpack.c.bf16 %v389, %v389
      %v402 = vpack.c.bf16 %v391, %v391
      %v403 = vpack.c.bf16 %v393, %v393
      %v404 = vpack.c.bf16 %v395, %v395
      %v405 = vpack.c.bf16 %v397, %v397
      %v406 = vunpack.c.l.bf16 %v398
      %v407 = vunpack.c.l.bf16 %v399
      %v408 = vunpack.c.l.bf16 %v400
      %v409 = vunpack.c.l.bf16 %v401
      %v410 = vunpack.c.l.bf16 %v402
      %v411 = vunpack.c.l.bf16 %v403
      %v412 = vunpack.c.l.bf16 %v404
      %v413 = vunpack.c.l.bf16 %v405
      %v414 = vadd.f32 %v406, 1.0
      %v415 = vadd.f32 %v407, 1.0
      %v416 = vadd.f32 %v408, 1.0
      %v417 = vadd.f32 %v409, 1.0
      %v418 = vadd.f32 %v410, 1.0
      %v419 = vadd.f32 %v411, 1.0
      %v420 = vadd.f32 %v412, 1.0
      %v421 = vadd.f32 %v413, 1.0
      %v422 = vpack.c.bf16 %v414, %v414
      %v423 = vpack.c.bf16 %v415, %v415
      %v424 = vpack.c.bf16 %v416, %v416
      %v425 = vpack.c.bf16 %v417, %v417
      %v426 = vpack.c.bf16 %v418, %v418
      %v427 = vpack.c.bf16 %v419, %v419
      %v428 = vpack.c.bf16 %v420, %v420
      %v429 = vpack.c.bf16 %v421, %v421
      %v430 = vunpack.c.h.bf16 1065369472
      %v431 = vunpack.c.l.bf16 1065369472
      %v432 = vunpack.c.h.bf16 %v422
      %v433 = vunpack.c.l.bf16 %v422
      %v434 = vrcp.pop %v432
      %v435 = vmul.f32 %v430, %v434
      %v436 = vrcp.pop %v433
      %v437 = vmul.f32 %v431, %v436
      %v438 = vpack.c.bf16 %v435, %v437
      %v439 = vunpack.c.h.bf16 %v423
      %v440 = vunpack.c.l.bf16 %v423
      %v441 = vrcp.pop %v439
      %v442 = vmul.f32 %v430, %v441
      %v443 = vrcp.pop %v440
      %v444 = vmul.f32 %v431, %v443
      %v445 = vpack.c.bf16 %v442, %v444
      %v446 = vunpack.c.h.bf16 %v424
      %v447 = vunpack.c.l.bf16 %v424
      %v448 = vrcp.pop %v446
      %v449 = vmul.f32 %v430, %v448
      %v450 = vrcp.pop %v447
      %v451 = vmul.f32 %v431, %v450
      %v452 = vpack.c.bf16 %v449, %v451
      %v453 = vunpack.c.h.bf16 %v425
      %v454 = vunpack.c.l.bf16 %v425
      %v455 = vrcp.pop %v453
      %v456 = vmul.f32 %v430, %v455
      %v457 = vrcp.pop %v454
      %v458 = vmul.f32 %v431, %v457
      %v459 = vpack.c.bf16 %v456, %v458
      %v460 = vunpack.c.h.bf16 %v426
      %v461 = vunpack.c.l.bf16 %v426
      %v462 = vrcp.pop %v460
      %v463 = vmul.f32 %v430, %v462
      %v464 = vrcp.pop %v461
      %v465 = vmul.f32 %v431, %v464
      %v466 = vpack.c.bf16 %v463, %v465
      %v467 = vunpack.c.h.bf16 %v427
      %v468 = vunpack.c.l.bf16 %v427
      %v469 = vrcp.pop %v467
      %v470 = vmul.f32 %v430, %v469
      %v471 = vrcp.pop %v468
      %v472 = vmul.f32 %v431, %v471
      %v473 = vpack.c.bf16 %v470, %v472
      %v474 = vunpack.c.h.bf16 %v428
      %v475 = vunpack.c.l.bf16 %v428
      %v476 = vrcp.pop %v474
      %v477 = vmul.f32 %v430, %v476
      %v478 = vrcp.pop %v475
      %v479 = vmul.f32 %v431, %v478
      %v480 = vpack.c.bf16 %v477, %v479
      %v481 = vunpack.c.h.bf16 %v429
      %v482 = vunpack.c.l.bf16 %v429
      %v483 = vrcp.pop %v481
      %v484 = vmul.f32 %v430, %v483
      %v485 = vrcp.pop %v482
      %v486 = vmul.f32 %v431, %v485
      %v487 = vpack.c.bf16 %v484, %v486
      %v488 = vunpack.c.l.bf16 %v358
      %v489 = vunpack.c.l.bf16 %v359
      %v490 = vunpack.c.l.bf16 %v360
      %v491 = vunpack.c.l.bf16 %v361
      %v492 = vunpack.c.l.bf16 %v362
      %v493 = vunpack.c.l.bf16 %v363
      %v494 = vunpack.c.l.bf16 %v364
      %v495 = vunpack.c.l.bf16 %v365
      %v496 = vunpack.c.l.bf16 %v438
      %v497 = vunpack.c.l.bf16 %v445
      %v498 = vunpack.c.l.bf16 %v452
      %v499 = vunpack.c.l.bf16 %v459
      %v500 = vunpack.c.l.bf16 %v466
      %v501 = vunpack.c.l.bf16 %v473
      %v502 = vunpack.c.l.bf16 %v480
      %v503 = vunpack.c.l.bf16 %v487
      %v504 = vmul.f32 %v488, %v496
      %v505 = vmul.f32 %v489, %v497
      %v506 = vmul.f32 %v490, %v498
      %v507 = vmul.f32 %v491, %v499
      %v508 = vmul.f32 %v492, %v500
      %v509 = vmul.f32 %v493, %v501
      %v510 = vmul.f32 %v494, %v502
      %v511 = vmul.f32 %v495, %v503
      %v512 = vpack.c.bf16 %v505, %v504
      %v513 = vpack.c.bf16 %v507, %v506
      %v514 = vpack.c.bf16 %v509, %v508
      %v515 = vpack.c.bf16 %v511, %v510
      %v516 = vld [vmem:[%s3] sm:$0xf]
      %v517 = vld [vmem:[%s3 + $0x4] sm:$0xf]
      %v518 = vld [vmem:[%s3 + $0x8] sm:$0xf]
      %v519 = vld [vmem:[%s3 + $0xc] sm:$0xf]
      %v520 = vld [vmem:[%s3 + $0x10] sm:$0xf]
      %v521 = vld [vmem:[%s3 + $0x14] sm:$0xf]
      %v522 = vld [vmem:[%s3 + $0x18] sm:$0xf]
      %v523 = vld [vmem:[%s3 + $0x1c] sm:$0xf]
      %v524 = vld [vmem:[%s3 + $0x20] sm:$0xf]
      %v525 = vld [vmem:[%s3 + $0x24] sm:$0xf]
      %v526 = vld [vmem:[%s3 + $0x28] sm:$0xf]
      %v527 = vld [vmem:[%s3 + $0x2c] sm:$0xf]
      %v528 = vld [vmem:[%s3 + $0x30] sm:$0xf]
      %v529 = vld [vmem:[%s3 + $0x34] sm:$0xf]
      %v530 = vld [vmem:[%s3 + $0x38] sm:$0xf]
      %v531 = vld [vmem:[%s3 + $0x3c] sm:$0xf]
      %v532 = vld [vmem:[%s4] sm:$0x1]
      %v534 = vperm.slane %v532, 0
      %v552 = vunpack.c.l.b16 %v516
      %v553 = vunpack.c.l.b16 %v517
      %v554 = vunpack.c.l.b16 %v518
      %v555 = vunpack.c.l.b16 %v519
      %v556 = vunpack.c.l.b16 %v520
      %v557 = vunpack.c.l.b16 %v521
      %v558 = vunpack.c.l.b16 %v522
      %v559 = vunpack.c.l.b16 %v523
      %v560 = vunpack.c.l.b16 %v524
      %v561 = vunpack.c.l.b16 %v525
      %v562 = vunpack.c.l.b16 %v526
      %v563 = vunpack.c.l.b16 %v527
      %v564 = vunpack.c.l.b16 %v528
      %v565 = vunpack.c.l.b16 %v529
      %v566 = vunpack.c.l.b16 %v530
      %v567 = vunpack.c.l.b16 %v531
      %v568 = vpack.c.b16 %v553, %v552
      %v569 = vpack.c.b16 %v555, %v554
      %v570 = vpack.c.b16 %v557, %v556
      %v571 = vpack.c.b16 %v559, %v558
      %v572 = vpack.c.b16 %v561, %v560
      %v573 = vpack.c.b16 %v563, %v562
      %v574 = vpack.c.b16 %v565, %v564
      %v575 = vpack.c.b16 %v567, %v566
      %584 = vmatpush.bf16.msra.mxu0 %v575
      %585 = vmatpush.bf16.msra.mxu0 %v574
      %586 = vmatpush.bf16.msra.mxu0 %v573
      %587 = vmatpush.bf16.msra.mxu0 %v572
      %588 = vmatpush.bf16.msra.mxu0 %v571
      %589 = vmatpush.bf16.msra.mxu0 %v570
      %590 = vmatpush.bf16.msra.mxu0 %v569
      %591 = vmatpush.bf16.msra.mxu0 %v568
      %592 = vmatmul.bf16.gmra.mxu0 %v512
      %v593 = vpop.f32.mrf.mxu0
      %v594 = vadd.f32 %v534, %v593
      %v595 = vpop.f32.mrf.mxu0
      %v596 = vadd.f32 %v534, %v595
      %597 = vmatmul.bf16.gmra.mxu0 %v513
      %v598 = vpop.f32.mrf.mxu0
      %v599 = vadd.f32 %v534, %v598
      %v600 = vpop.f32.mrf.mxu0
      %v601 = vadd.f32 %v534, %v600
      %602 = vmatmul.bf16.gmra.mxu0 %v514
      %v603 = vpop.f32.mrf.mxu0
      %v604 = vadd.f32 %v534, %v603
      %v605 = vpop.f32.mrf.mxu0
      %v606 = vadd.f32 %v534, %v605
      %607 = vmatmul.bf16.gmra.mxu0 %v515
      %v608 = vpop.f32.mrf.mxu0
      %v609 = vadd.f32 %v534, %v608
      %v610 = vpop.f32.mrf.mxu0
      %v611 = vadd.f32 %v534, %v610
      %612 = vdwg.mxu0
      %v613 = vpack.c.bf16 %v594, %v594
      %v614 = vpack.c.bf16 %v596, %v596
      %v615 = vpack.c.bf16 %v599, %v599
      %v616 = vpack.c.bf16 %v601, %v601
      %v617 = vpack.c.bf16 %v604, %v604
      %v618 = vpack.c.bf16 %v606, %v606
      %v619 = vpack.c.bf16 %v609, %v609
      %v620 = vpack.c.bf16 %v611, %v611
      %v621 = vxor.u32 %v613, 2147516416
      %v622 = vxor.u32 %v614, 2147516416
      %v623 = vxor.u32 %v615, 2147516416
      %v624 = vxor.u32 %v616, 2147516416
      %v625 = vxor.u32 %v617, 2147516416
      %v626 = vxor.u32 %v618, 2147516416
      %v627 = vxor.u32 %v619, 2147516416
      %v628 = vxor.u32 %v620, 2147516416
      %v629 = vunpack.c.l.bf16 %v621
      %v630 = vunpack.c.l.bf16 %v622
      %v631 = vunpack.c.l.bf16 %v623
      %v632 = vunpack.c.l.bf16 %v624
      %v633 = vunpack.c.l.bf16 %v625
      %v634 = vunpack.c.l.bf16 %v626
      %v635 = vunpack.c.l.bf16 %v627
      %v636 = vunpack.c.l.bf16 %v628
      %v637 = vmul.f32 %v629, 1.442695
      %v638 = vpow.pop %v637
      %v639 = vmul.f32 %v630, 1.442695
      %v640 = vpow.pop %v639
      %v641 = vmul.f32 %v631, 1.442695
      %v642 = vpow.pop %v641
      %v643 = vmul.f32 %v632, 1.442695
      %v644 = vpow.pop %v643
      %v645 = vmul.f32 %v633, 1.442695
      %v646 = vpow.pop %v645
      %v647 = vmul.f32 %v634, 1.442695
      %v648 = vpow.pop %v647
      %v649 = vmul.f32 %v635, 1.442695
      %v650 = vpow.pop %v649
      %v651 = vmul.f32 %v636, 1.442695
      %v652 = vpow.pop %v651
      %v653 = vpack.c.bf16 %v638, %v638
      %v654 = vpack.c.bf16 %v640, %v640
      %v655 = vpack.c.bf16 %v642, %v642
      %v656 = vpack.c.bf16 %v644, %v644
      %v657 = vpack.c.bf16 %v646, %v646
      %v658 = vpack.c.bf16 %v648, %v648
      %v659 = vpack.c.bf16 %v650, %v650
      %v660 = vpack.c.bf16 %v652, %v652
      %v661 = vunpack.c.l.bf16 %v653
      %v662 = vunpack.c.l.bf16 %v654
      %v663 = vunpack.c.l.bf16 %v655
      %v664 = vunpack.c.l.bf16 %v656
      %v665 = vunpack.c.l.bf16 %v657
      %v666 = vunpack.c.l.bf16 %v658
      %v667 = vunpack.c.l.bf16 %v659
      %v668 = vunpack.c.l.bf16 %v660
      %v669 = vadd.f32 %v661, 1.0
      %v670 = vadd.f32 %v662, 1.0
      %v671 = vadd.f32 %v663, 1.0
      %v672 = vadd.f32 %v664, 1.0
      %v673 = vadd.f32 %v665, 1.0
      %v674 = vadd.f32 %v666, 1.0
      %v675 = vadd.f32 %v667, 1.0
      %v676 = vadd.f32 %v668, 1.0
      %v677 = vpack.c.bf16 %v669, %v669
      %v678 = vpack.c.bf16 %v670, %v670
      %v679 = vpack.c.bf16 %v671, %v671
      %v680 = vpack.c.bf16 %v672, %v672
      %v681 = vpack.c.bf16 %v673, %v673
      %v682 = vpack.c.bf16 %v674, %v674
      %v683 = vpack.c.bf16 %v675, %v675
      %v684 = vpack.c.bf16 %v676, %v676
      %v685 = vunpack.c.h.bf16 %v677
      %v686 = vunpack.c.l.bf16 %v677
      %v687 = vrcp.pop %v685
      %v688 = vmul.f32 %v430, %v687
      %v689 = vrcp.pop %v686
      %v690 = vmul.f32 %v431, %v689
      %v691 = vpack.c.bf16 %v688, %v690
      %v692 = vunpack.c.h.bf16 %v678
      %v693 = vunpack.c.l.bf16 %v678
      %v694 = vrcp.pop %v692
      %v695 = vmul.f32 %v430, %v694
      %v696 = vrcp.pop %v693
      %v697 = vmul.f32 %v431, %v696
      %v698 = vpack.c.bf16 %v695, %v697
      %v699 = vunpack.c.h.bf16 %v679
      %v700 = vunpack.c.l.bf16 %v679
      %v701 = vrcp.pop %v699
      %v702 = vmul.f32 %v430, %v701
      %v703 = vrcp.pop %v700
      %v704 = vmul.f32 %v431, %v703
      %v705 = vpack.c.bf16 %v702, %v704
      %v706 = vunpack.c.h.bf16 %v680
      %v707 = vunpack.c.l.bf16 %v680
      %v708 = vrcp.pop %v706
      %v709 = vmul.f32 %v430, %v708
      %v710 = vrcp.pop %v707
      %v711 = vmul.f32 %v431, %v710
      %v712 = vpack.c.bf16 %v709, %v711
      %v713 = vunpack.c.h.bf16 %v681
      %v714 = vunpack.c.l.bf16 %v681
      %v715 = vrcp.pop %v713
      %v716 = vmul.f32 %v430, %v715
      %v717 = vrcp.pop %v714
      %v718 = vmul.f32 %v431, %v717
      %v719 = vpack.c.bf16 %v716, %v718
      %v720 = vunpack.c.h.bf16 %v682
      %v721 = vunpack.c.l.bf16 %v682
      %v722 = vrcp.pop %v720
      %v723 = vmul.f32 %v430, %v722
      %v724 = vrcp.pop %v721
      %v725 = vmul.f32 %v431, %v724
      %v726 = vpack.c.bf16 %v723, %v725
      %v727 = vunpack.c.h.bf16 %v683
      %v728 = vunpack.c.l.bf16 %v683
      %v729 = vrcp.pop %v727
      %v730 = vmul.f32 %v430, %v729
      %v731 = vrcp.pop %v728
      %v732 = vmul.f32 %v431, %v731
      %v733 = vpack.c.bf16 %v730, %v732
      %v734 = vunpack.c.h.bf16 %v684
      %v735 = vunpack.c.l.bf16 %v684
      %v736 = vrcp.pop %v734
      %v737 = vmul.f32 %v430, %v736
      %v738 = vrcp.pop %v735
      %v739 = vmul.f32 %v431, %v738
      %v740 = vpack.c.bf16 %v737, %v739
      %v741 = vunpack.c.l.bf16 %v613
      %v742 = vunpack.c.l.bf16 %v614
      %v743 = vunpack.c.l.bf16 %v615
      %v744 = vunpack.c.l.bf16 %v616
      %v745 = vunpack.c.l.bf16 %v617
      %v746 = vunpack.c.l.bf16 %v618
      %v747 = vunpack.c.l.bf16 %v619
      %v748 = vunpack.c.l.bf16 %v620
      %v749 = vunpack.c.l.bf16 %v691
      %v750 = vunpack.c.l.bf16 %v698
      %v751 = vunpack.c.l.bf16 %v705
      %v752 = vunpack.c.l.bf16 %v712
      %v753 = vunpack.c.l.bf16 %v719
      %v754 = vunpack.c.l.bf16 %v726
      %v755 = vunpack.c.l.bf16 %v733
      %v756 = vunpack.c.l.bf16 %v740
      %v757 = vmul.f32 %v741, %v749
      %v758 = vmul.f32 %v742, %v750
      %v759 = vmul.f32 %v743, %v751
      %v760 = vmul.f32 %v744, %v752
      %v761 = vmul.f32 %v745, %v753
      %v762 = vmul.f32 %v746, %v754
      %v763 = vmul.f32 %v747, %v755
      %v764 = vmul.f32 %v748, %v756
      %v765 = vpack.c.bf16 %v758, %v757
      %v766 = vpack.c.bf16 %v760, %v759
      %v767 = vpack.c.bf16 %v762, %v761
      %v768 = vpack.c.bf16 %v764, %v763
      %v769 = vld [vmem:[%s5] sm:$0xf]
      %v770 = vld [vmem:[%s5 + $0x4] sm:$0xf]
      %v771 = vld [vmem:[%s5 + $0x8] sm:$0xf]
      %v772 = vld [vmem:[%s5 + $0xc] sm:$0xf]
      %v773 = vld [vmem:[%s5 + $0x10] sm:$0xf]
      %v774 = vld [vmem:[%s5 + $0x14] sm:$0xf]
      %v775 = vld [vmem:[%s5 + $0x18] sm:$0xf]
      %v776 = vld [vmem:[%s5 + $0x1c] sm:$0xf]
      %v777 = vld [vmem:[%s5 + $0x20] sm:$0xf]
      %v778 = vld [vmem:[%s5 + $0x24] sm:$0xf]
      %v779 = vld [vmem:[%s5 + $0x28] sm:$0xf]
      %v780 = vld [vmem:[%s5 + $0x2c] sm:$0xf]
      %v781 = vld [vmem:[%s5 + $0x30] sm:$0xf]
      %v782 = vld [vmem:[%s5 + $0x34] sm:$0xf]
      %v783 = vld [vmem:[%s5 + $0x38] sm:$0xf]
      %v784 = vld [vmem:[%s5 + $0x3c] sm:$0xf]
      %v785 = vld [vmem:[%s6] sm:$0x1]
      %v787 = vperm.slane %v785, 0
      %v805 = vunpack.c.l.b16 %v769
      %v806 = vunpack.c.l.b16 %v770
      %v807 = vunpack.c.l.b16 %v771
      %v808 = vunpack.c.l.b16 %v772
      %v809 = vunpack.c.l.b16 %v773
      %v810 = vunpack.c.l.b16 %v774
      %v811 = vunpack.c.l.b16 %v775
      %v812 = vunpack.c.l.b16 %v776
      %v813 = vunpack.c.l.b16 %v777
      %v814 = vunpack.c.l.b16 %v778
      %v815 = vunpack.c.l.b16 %v779
      %v816 = vunpack.c.l.b16 %v780
      %v817 = vunpack.c.l.b16 %v781
      %v818 = vunpack.c.l.b16 %v782
      %v819 = vunpack.c.l.b16 %v783
      %v820 = vunpack.c.l.b16 %v784
      %v821 = vpack.c.b16 %v806, %v805
      %v822 = vpack.c.b16 %v808, %v807
      %v823 = vpack.c.b16 %v810, %v809
      %v824 = vpack.c.b16 %v812, %v811
      %v825 = vpack.c.b16 %v814, %v813
      %v826 = vpack.c.b16 %v816, %v815
      %v827 = vpack.c.b16 %v818, %v817
      %v828 = vpack.c.b16 %v820, %v819
      %837 = vmatpush.bf16.msra.mxu0 %v828
      %838 = vmatpush.bf16.msra.mxu0 %v827
      %839 = vmatpush.bf16.msra.mxu0 %v826
      %840 = vmatpush.bf16.msra.mxu0 %v825
      %841 = vmatpush.bf16.msra.mxu0 %v824
      %842 = vmatpush.bf16.msra.mxu0 %v823
      %843 = vmatpush.bf16.msra.mxu0 %v822
      %844 = vmatpush.bf16.msra.mxu0 %v821
      %845 = vmatmul.bf16.gmra.mxu0 %v765
      %v846 = vpop.f32.mrf.mxu0
      %v847 = vadd.f32 %v787, %v846
      %v848 = vpop.f32.mrf.mxu0
      %v849 = vadd.f32 %v787, %v848
      %850 = vmatmul.bf16.gmra.mxu0 %v766
      %v851 = vpop.f32.mrf.mxu0
      %v852 = vadd.f32 %v787, %v851
      %v853 = vpop.f32.mrf.mxu0
      %v854 = vadd.f32 %v787, %v853
      %855 = vmatmul.bf16.gmra.mxu0 %v767
      %v856 = vpop.f32.mrf.mxu0
      %v857 = vadd.f32 %v787, %v856
      %v858 = vpop.f32.mrf.mxu0
      %v859 = vadd.f32 %v787, %v858
      %860 = vmatmul.bf16.gmra.mxu0 %v768
      %v861 = vpop.f32.mrf.mxu0
      %v862 = vadd.f32 %v787, %v861
      %v863 = vpop.f32.mrf.mxu0
      %v864 = vadd.f32 %v787, %v863
      %865 = vdwg.mxu0
      %vm866 = vcmask 130048
      %867 = vst.msk [vmem:[%s280] sm:$0xff] %vm866, %v847
      %868 = vst.msk [vmem:[%s280 + $0x8] sm:$0xff] %vm866, %v849
      %869 = vst.msk [vmem:[%s280 + $0x10] sm:$0xff] %vm866, %v852
      %870 = vst.msk [vmem:[%s280 + $0x18] sm:$0xff] %vm866, %v854
      %871 = vst.msk [vmem:[%s280 + $0x20] sm:$0xff] %vm866, %v857
      %872 = vst.msk [vmem:[%s280 + $0x28] sm:$0xff] %vm866, %v859
      %873 = vst.msk [vmem:[%s280 + $0x30] sm:$0xff] %vm866, %v862
      %874 = vst.msk [vmem:[%s280 + $0x38] sm:$0xff] %vm866, %v864
      %s875 = smul.u32 8, %s18
      %p876 = scmp.lt.s32.totalorder %s875, 15
      %s877 = scalar_select %p876, %s875, 15
      %s878 = smul.addr %s877, 8
      %s879 = scalar_lea.vmem %s7, %s878
      // Predicated region
      $region49: #{tpu_custom_call.1} parent=47 // pred_check
        %p880 = pneg %p188
      $region50: #{tpu_custom_call.1} parent=47 // pred_check_branch
        %882 = sbr.rel (%p880) target = $region52
      $region51: #{tpu_custom_call.1} parent=47 // pred_region
        %s883 = smul.u32 8, %s18
      $region52: #{tpu_custom_call.1} parent=47 // pred_fallthru
        _
    $region48: #{tpu_custom_call.1} parent=5 // pred_fallthru
      _
    %p884 = scmp.le.s32.totalorder 2, %s13
    // Predicated region
    $region53: #{tpu_custom_call.1} parent=5 // pred_check
      %p885 = pneg %p884
    $region54: #{tpu_custom_call.1} parent=5 // pred_check_branch
      %887 = sbr.rel (%p885) target = $region56
    $region55: #{tpu_custom_call.1} parent=5 // pred_region
      %s888 = ssub.s32 %s13, 2
      // Predicated region
      $region57: #{tpu_custom_call.1} parent=55 // pred_check
        %p889 = pneg %p194
      $region58: #{tpu_custom_call.1} parent=55 // pred_check_branch
        %891 = sbr.rel (%p889) target = $region60
      $region59: #{tpu_custom_call.1} parent=55 // pred_region
        %s892 = smul.u32 8, %s19
        %p893 = scmp.lt.s32.totalorder %s892, 15
        %s894 = scalar_select %p893, %s892, 15
        %s895 = smul.addr %s894, 8
        %s896 = scalar_lea.vmem %s7, %s895
      $region60: #{tpu_custom_call.1} parent=55 // pred_fallthru
        _
    $region56: #{tpu_custom_call.1} parent=5 // pred_fallthru
      _
  $region6: #{tpu_custom_call.1} parent=0 // loop_footer
    %s17 = sadd.s32 1, %s13
  $region7: #{tpu_custom_call.1} parent=0 // loop_footer_branch
    %12 = sbr.rel target = $region3
  $region8: #{tpu_custom_call.1} parent=0 // loop_exit
    _

// kernel: tpu_custom_call.1
$region0: #{tpu_custom_call.1}
  #allocation0 [shape = 'u32[]', space=smem, size = 0x4, offset = 0x4, fixed_abs, tag = 'smem constant byte address 0x4 - core index']
  #allocation1 [shape = 'u32[72,128]{1,0:T(1,128)}', space=vmem, size = 0x9000, scoped, tag = 'internal scratch']
  %s0 = inlined_call_operand.vmem [shape: f32[128,32], index: 0, kind: input, shape index: {}]
  %s1 = inlined_call_operand.vmem [shape: bf16[32,128], index: 1, kind: input, shape index: {}]
  %s2 = inlined_call_operand.vmem [shape: f32[1,128], index: 2, kind: input, shape index: {}]
  %s3 = inlined_call_operand.vmem [shape: bf16[128,128], index: 3, kind: input, shape index: {}]
  %s4 = inlined_call_operand.vmem [shape: f32[1,128], index: 4, kind: input, shape index: {}]
  %s5 = inlined_call_operand.vmem [shape: bf16[128,16], index: 5, kind: input, shape index: {}]
  %s6 = inlined_call_operand.vmem [shape: f32[1,16], index: 6, kind: input, shape index: {}]
  %s7 = inlined_call_operand.vmem [shape: f32[128,16], index: 7, kind: output, shape index: {}]
  %s8 = sld [smem:[#allocation0]]
  $region61: #{tpu_custom_call.1} parent=0
    _
  %s10 = ssub.s32 1, %s8
  %s11 = scalar_select 0, %s10, %s8
  loop: start=0, step=1, limit=4
  $region2: #{tpu_custom_call.1} parent=0 // loop_pre_header
    _
  $region3: #{tpu_custom_call.1} parent=0 // loop_header
    %s13 = sphi 0, %s17
    %p14 = scmp.ge.s32.totalorder %s13, 4
    %s23 = sphi 0, %s25
    %s26 = sphi 0, %s23
    %s27 = sphi 0, %s26
    %s43 = sphi 0, %s27
    %s47 = sphi 0, %s47
    %s49 = sphi 0, %s47
    %s50 = sphi 0, %s49
    %s64 = sphi 0, %s50
    %s68 = sphi 0, %s68
    %s70 = sphi 0, %s68
    %s71 = sphi 0, %s70
    %s85 = sphi 0, %s71
    %s89 = sphi 0, %s89
    %s91 = sphi 0, %s89
    %s92 = sphi 0, %s91
    %s106 = sphi 0, %s92
    %s110 = sphi 0, %s110
    %s112 = sphi 0, %s110
    %s113 = sphi 0, %s112
    %s127 = sphi 0, %s113
    %s131 = sphi 0, %s131
    %s133 = sphi 0, %s131
    %s134 = sphi 0, %s133
    %s148 = sphi 0, %s134
    %s152 = sphi 0, %s152
    %s154 = sphi 0, %s152
    %s155 = sphi 0, %s154
    %s169 = sphi 0, %s155
    %s175 = sphi 0, %s177
    %s178 = sphi 0, %s175
    %s179 = sphi 0, %s178
    %s195 = sphi 0, %s179
  $region4: #{tpu_custom_call.1} parent=0 // loop_header_branch
    %16 = sbr.rel (%p14) target = $region8
  $region5: #{tpu_custom_call.1} parent=0 // loop_body
    %s18 = ssub.s32 %s13, 1
    %s19 = ssub.s32 %s13, 2
    %s20 = sadd.s32 %s13, 1
    %s21 = ssub.s32 %s13, %s20
    %p22 = scmp.eq.s32.totalorder %s21, 0
    %s24 = sadd.s32 %s23, 1
    %s25 = scalar_select %p22, %s23, %s24
    %p28 = pneg %p22
    %p29 = scmp.eq.s32.totalorder %s13, 1
    %p30 = por %p28, %p29
    %p31 = scmp.ne.s32.totalorder %s23, %s26
    %p32 = scmp.eq.s32.totalorder %s13, 0
    %p33 = por %p31, %p32
    %p34 = scmp.ne.s32.totalorder %s23, %s26
    %p35 = scmp.eq.s32.totalorder %s18, 1
    %p36 = por %p34, %p35
    %p37 = scmp.ne.s32.totalorder %s26, %s27
    %p38 = scmp.eq.s32.totalorder %s18, 0
    %p39 = por %p37, %p38
    %p40 = scmp.ne.s32.totalorder %s26, %s27
    %p41 = scmp.eq.s32.totalorder %s19, 1
    %p42 = por %p40, %p41
    %p44 = scmp.ne.s32.totalorder %s27, %s43
    %p45 = scmp.eq.s32.totalorder %s19, 0
    %p46 = por %p44, %p45
    %s48 = sadd.s32 %s47, 1
    %p51 = scmp.eq.s32.totalorder %s13, 1
    %p52 = scmp.ne.s32.totalorder %s47, %s49
    %p53 = scmp.eq.s32.totalorder %s13, 0
    %p54 = por %p52, %p53
    %p55 = scmp.ne.s32.totalorder %s47, %s49
    %p56 = scmp.eq.s32.totalorder %s18, 1
    %p57 = por %p55, %p56
    %p58 = scmp.ne.s32.totalorder %s49, %s50
    %p59 = scmp.eq.s32.totalorder %s18, 0
    %p60 = por %p58, %p59
    %p61 = scmp.ne.s32.totalorder %s49, %s50
    %p62 = scmp.eq.s32.totalorder %s19, 1
    %p63 = por %p61, %p62
    %p65 = scmp.ne.s32.totalorder %s50, %s64
    %p66 = scmp.eq.s32.totalorder %s19, 0
    %p67 = por %p65, %p66
    %s69 = sadd.s32 %s68, 1
    %p72 = scmp.eq.s32.totalorder %s13, 1
    %p73 = scmp.ne.s32.totalorder %s68, %s70
    %p74 = scmp.eq.s32.totalorder %s13, 0
    %p75 = por %p73, %p74
    %p76 = scmp.ne.s32.totalorder %s68, %s70
    %p77 = scmp.eq.s32.totalorder %s18, 1
    %p78 = por %p76, %p77
    %p79 = scmp.ne.s32.totalorder %s70, %s71
    %p80 = scmp.eq.s32.totalorder %s18, 0
    %p81 = por %p79, %p80
    %p82 = scmp.ne.s32.totalorder %s70, %s71
    %p83 = scmp.eq.s32.totalorder %s19, 1
    %p84 = por %p82, %p83
    %p86 = scmp.ne.s32.totalorder %s71, %s85
    %p87 = scmp.eq.s32.totalorder %s19, 0
    %p88 = por %p86, %p87
    %s90 = sadd.s32 %s89, 1
    %p93 = scmp.eq.s32.totalorder %s13, 1
    %p94 = scmp.ne.s32.totalorder %s89, %s91
    %p95 = scmp.eq.s32.totalorder %s13, 0
    %p96 = por %p94, %p95
    %p97 = scmp.ne.s32.totalorder %s89, %s91
    %p98 = scmp.eq.s32.totalorder %s18, 1
    %p99 = por %p97, %p98
    %p100 = scmp.ne.s32.totalorder %s91, %s92
    %p101 = scmp.eq.s32.totalorder %s18, 0
    %p102 = por %p100, %p101
    %p103 = scmp.ne.s32.totalorder %s91, %s92
    %p104 = scmp.eq.s32.totalorder %s19, 1
    %p105 = por %p103, %p104
    %p107 = scmp.ne.s32.totalorder %s92, %s106
    %p108 = scmp.eq.s32.totalorder %s19, 0
    %p109 = por %p107, %p108
    %s111 = sadd.s32 %s110, 1
    %p114 = scmp.eq.s32.totalorder %s13, 1
    %p115 = scmp.ne.s32.totalorder %s110, %s112
    %p116 = scmp.eq.s32.totalorder %s13, 0
    %p117 = por %p115, %p116
    %p118 = scmp.ne.s32.totalorder %s110, %s112
    %p119 = scmp.eq.s32.totalorder %s18, 1
    %p120 = por %p118, %p119
    %p121 = scmp.ne.s32.totalorder %s112, %s113
    %p122 = scmp.eq.s32.totalorder %s18, 0
    %p123 = por %p121, %p122
    %p124 = scmp.ne.s32.totalorder %s112, %s113
    %p125 = scmp.eq.s32.totalorder %s19, 1
    %p126 = por %p124, %p125
    %p128 = scmp.ne.s32.totalorder %s113, %s127
    %p129 = scmp.eq.s32.totalorder %s19, 0
    %p130 = por %p128, %p129
    %s132 = sadd.s32 %s131, 1
    %p135 = scmp.eq.s32.totalorder %s13, 1
    %p136 = scmp.ne.s32.totalorder %s131, %s133
    %p137 = scmp.eq.s32.totalorder %s13, 0
    %p138 = por %p136, %p137
    %p139 = scmp.ne.s32.totalorder %s131, %s133
    %p140 = scmp.eq.s32.totalorder %s18, 1
    %p141 = por %p139, %p140
    %p142 = scmp.ne.s32.totalorder %s133, %s134
    %p143 = scmp.eq.s32.totalorder %s18, 0
    %p144 = por %p142, %p143
    %p145 = scmp.ne.s32.totalorder %s133, %s134
    %p146 = scmp.eq.s32.totalorder %s19, 1
    %p147 = por %p145, %p146
    %p149 = scmp.ne.s32.totalorder %s134, %s148
    %p150 = scmp.eq.s32.totalorder %s19, 0
    %p151 = por %p149, %p150
    %s153 = sadd.s32 %s152, 1
    %p156 = scmp.eq.s32.totalorder %s13, 1
    %p157 = scmp.ne.s32.totalorder %s152, %s154
    %p158 = scmp.eq.s32.totalorder %s13, 0
    %p159 = por %p157, %p158
    %p160 = scmp.ne.s32.totalorder %s152, %s154
    %p161 = scmp.eq.s32.totalorder %s18, 1
    %p162 = por %p160, %p161
    %p163 = scmp.ne.s32.totalorder %s154, %s155
    %p164 = scmp.eq.s32.totalorder %s18, 0
    %p165 = por %p163, %p164
    %p166 = scmp.ne.s32.totalorder %s154, %s155
    %p167 = scmp.eq.s32.totalorder %s19, 1
    %p168 = por %p166, %p167
    %p170 = scmp.ne.s32.totalorder %s155, %s169
    %p171 = scmp.eq.s32.totalorder %s19, 0
    %p172 = por %p170, %p171
    %s173 = ssub.s32 %s13, %s20
    %p174 = scmp.eq.s32.totalorder %s173, 0
    %s176 = sadd.s32 %s175, 1
    %s177 = scalar_select %p174, %s175, %s176
    %p180 = pneg %p174
    %p181 = scmp.eq.s32.totalorder %s13, 1
    %p182 = por %p180, %p181
    %p183 = scmp.ne.s32.totalorder %s175, %s178
    %p184 = scmp.eq.s32.totalorder %s13, 0
    %p185 = por %p183, %p184
    %p186 = scmp.ne.s32.totalorder %s175, %s178
    %p187 = scmp.eq.s32.totalorder %s18, 1
    %p188 = por %p186, %p187
    %p189 = scmp.ne.s32.totalorder %s178, %s179
    %p190 = scmp.eq.s32.totalorder %s18, 0
    %p191 = por %p189, %p190
    %p192 = scmp.ne.s32.totalorder %s178, %s179
    %p193 = scmp.eq.s32.totalorder %s19, 1
    %p194 = por %p192, %p193
    %p196 = scmp.ne.s32.totalorder %s179, %s195
    %p197 = scmp.eq.s32.totalorder %s19, 0
    %p198 = por %p196, %p197
    %p199 = scmp.le.s32.totalorder 1, %s13
    %p200 = scmp.lt.s32.totalorder %s13, 3
    %p201 = pnand %p199, %p200
    %p202 = pneg %p201
    // Predicated region
    $region9: #{tpu_custom_call.1} parent=5 // pred_check
      _
    $region10: #{tpu_custom_call.1} parent=5 // pred_check_branch
      %204 = sbr.rel (%p201) target = $region12
    $region11: #{tpu_custom_call.1} parent=5 // pred_region
      %s205 = ssub.s32 %s13, 1
      // Predicated region
      $region13: #{tpu_custom_call.1} parent=11 // pred_check
        %p206 = pneg %p60
      $region14: #{tpu_custom_call.1} parent=11 // pred_check_branch
        %208 = sbr.rel (%p206) target = $region16
      $region15: #{tpu_custom_call.1} parent=11 // pred_region
        _
      $region16: #{tpu_custom_call.1} parent=11 // pred_fallthru
        _
      // Predicated region
      $region17: #{tpu_custom_call.1} parent=11 // pred_check
        %p209 = pneg %p81
      $region18: #{tpu_custom_call.1} parent=11 // pred_check_branch
        %211 = sbr.rel (%p209) target = $region20
      $region19: #{tpu_custom_call.1} parent=11 // pred_region
        _
      $region20: #{tpu_custom_call.1} parent=11 // pred_fallthru
        _
      // Predicated region
      $region21: #{tpu_custom_call.1} parent=11 // pred_check
        %p212 = pneg %p102
      $region22: #{tpu_custom_call.1} parent=11 // pred_check_branch
        %214 = sbr.rel (%p212) target = $region24
      $region23: #{tpu_custom_call.1} parent=11 // pred_region
        _
      $region24: #{tpu_custom_call.1} parent=11 // pred_fallthru
        _
      // Predicated region
      $region25: #{tpu_custom_call.1} parent=11 // pred_check
        %p215 = pneg %p123
      $region26: #{tpu_custom_call.1} parent=11 // pred_check_branch
        %217 = sbr.rel (%p215) target = $region28
      $region27: #{tpu_custom_call.1} parent=11 // pred_region
        _
      $region28: #{tpu_custom_call.1} parent=11 // pred_fallthru
        _
      // Predicated region
      $region29: #{tpu_custom_call.1} parent=11 // pred_check
        %p218 = pneg %p144
      $region30: #{tpu_custom_call.1} parent=11 // pred_check_branch
        %220 = sbr.rel (%p218) target = $region32
      $region31: #{tpu_custom_call.1} parent=11 // pred_region
        _
      $region32: #{tpu_custom_call.1} parent=11 // pred_fallthru
        _
      // Predicated region
      $region33: #{tpu_custom_call.1} parent=11 // pred_check
        %p221 = pneg %p165
      $region34: #{tpu_custom_call.1} parent=11 // pred_check_branch
        %223 = sbr.rel (%p221) target = $region36
      $region35: #{tpu_custom_call.1} parent=11 // pred_region
        _
      $region36: #{tpu_custom_call.1} parent=11 // pred_fallthru
        _
    $region12: #{tpu_custom_call.1} parent=5 // pred_fallthru
      _
    %p224 = scmp.lt.s32.totalorder %s13, 2
    // Predicated region
    $region37: #{tpu_custom_call.1} parent=5 // pred_check
      %p225 = pneg %p224
    $region38: #{tpu_custom_call.1} parent=5 // pred_check_branch
      %227 = sbr.rel (%p225) target = $region40
    $region39: #{tpu_custom_call.1} parent=5 // pred_region
      // Predicated region
      $region41: #{tpu_custom_call.1} parent=39 // pred_check
        %p228 = pneg %p33
      $region42: #{tpu_custom_call.1} parent=39 // pred_check_branch
        %230 = sbr.rel (%p228) target = $region44
      $region43: #{tpu_custom_call.1} parent=39 // pred_region
        %s231 = smul.u32 8, %s13
        %p232 = scmp.lt.s32.totalorder %s231, 15
        %s233 = scalar_select %p232, %s231, 15
        %s234 = smul.addr %s233, 8
        %s235 = scalar_lea.vmem %s0, %s234
        %s236 = smul.u32 8, %s13
      $region44: #{tpu_custom_call.1} parent=39 // pred_fallthru
        _
    $region40: #{tpu_custom_call.1} parent=5 // pred_fallthru
      _
    %p237 = scmp.le.s32.totalorder 1, %s13
    %p238 = scmp.lt.s32.totalorder %s13, 3
    %p239 = pnand %p237, %p238
    %p240 = pneg %p239
    // Predicated region
    $region45: #{tpu_custom_call.1} parent=5 // pred_check
      _
    $region46: #{tpu_custom_call.1} parent=5 // pred_check_branch
      %242 = sbr.rel (%p239) target = $region48
    $region47: #{tpu_custom_call.1} parent=5 // pred_region
      %s243 = ssub.s32 %s13, 1
      %s244 = smul.u32 8, %s18
      %p245 = scmp.lt.s32.totalorder %s244, 15
      %s246 = scalar_select %p245, %s244, 15
      %s247 = smul.addr %s246, 8
      %s248 = scalar_lea.vmem %s0, %s247
      %p249 = pneg %p39
      %p250 = pneg %p36
      %p251 = pneg %p60
      %p252 = pneg %p57
      %p253 = pneg %p81
      %p254 = pneg %p78
      %p255 = pneg %p102
      %p256 = pneg %p99
      %p257 = pneg %p123
      %p258 = pneg %p120
      %p259 = pneg %p144
      %p260 = pneg %p141
      %p261 = pneg %p165
      %p262 = pneg %p162
      %p263 = pneg %p191
      %p264 = pneg %p188
      %s265 = smul.u32 8, %s18
      %p266 = scmp.lt.s32.totalorder %s265, 15
      %s267 = scalar_select %p266, %s265, 15
      %s268 = smul.addr %s267, 8
      %s269 = scalar_lea.vmem %s7, %s268
      %s270 = smul.u32 8, %s18
      %p271 = scmp.lt.s32.totalorder %s270, 15
      %s272 = scalar_select %p271, %s270, 15
      %s273 = smul.addr %s272, 8
      %s274 = scalar_lea.vmem %s0, %s273
      %s275 = smul.u32 8, %s18
      %s276 = smul.u32 8, %s18
      %p277 = scmp.lt.s32.totalorder %s276, 15
      %s278 = scalar_select %p277, %s276, 15
      %s279 = smul.addr %s278, 8
      %s280 = scalar_lea.vmem %s7, %s279
      %s281 = smul.u32 8, %s18
      %v284 = vld [vmem:[%s274] sm:$0xff]
      %v285 = vld [vmem:[%s274 + $0x8] sm:$0xff]
      %v286 = vld [vmem:[%s274 + $0x10] sm:$0xff]
      %v287 = vld [vmem:[%s274 + $0x18] sm:$0xff]
      %v288 = vld [vmem:[%s274 + $0x20] sm:$0xff]
      %v289 = vld [vmem:[%s274 + $0x28] sm:$0xff]
      %v290 = vld [vmem:[%s274 + $0x30] sm:$0xff]
      %v291 = vld [vmem:[%s274 + $0x38] sm:$0xff]
      %v292 = vpack.c.bf16 %v285, %v284
      %v293 = vpack.c.bf16 %v287, %v286
      %v294 = vpack.c.bf16 %v289, %v288
      %v295 = vpack.c.bf16 %v291, %v290
      %v296 = vld [vmem:[%s1] sm:$0xf]
      %v297 = vld [vmem:[%s1 + $0x4] sm:$0xf]
      %v298 = vld [vmem:[%s1 + $0x8] sm:$0xf]
      %v299 = vld [vmem:[%s1 + $0xc] sm:$0xf]
      %v300 = vld [vmem:[%s2] sm:$0x1]
      %v302 = vperm.slane %v300, 0
      %v308 = vunpack.c.l.b16 %v296
      %v309 = vunpack.c.l.b16 %v297
      %v310 = vunpack.c.l.b16 %v298
      %v311 = vunpack.c.l.b16 %v299
      %v312 = vpack.c.b16 %v309, %v308
      %v313 = vpack.c.b16 %v311, %v310
      %vm316 = vcmask 261120
      %v318 = vsel %vm316, %v292, 0
      %v321 = vsel %vm316, %v293, 0
      %v324 = vsel %vm316, %v294, 0
      %v327 = vsel %vm316, %v295, 0
      %329 = vmatpush.bf16.msra.mxu0 0
      %330 = vmatpush.bf16.msra.mxu0 0
      %331 = vmatpush.bf16.msra.mxu0 0
      %332 = vmatpush.bf16.msra.mxu0 0
      %333 = vmatpush.bf16.msra.mxu0 0
      %334 = vmatpush.bf16.msra.mxu0 0
      %335 = vmatpush.bf16.msra.mxu0 %v313
      %336 = vmatpush.bf16.msra.mxu0 %v312
      %337 = vmatmul.bf16.gmra.mxu0 %v318
      %v338 = vpop.f32.mrf.mxu0
      %v339 = vadd.f32 %v302, %v338
      %v340 = vpop.f32.mrf.mxu0
      %v341 = vadd.f32 %v302, %v340
      %342 = vmatmul.bf16.gmra.mxu0 %v321
      %v343 = vpop.f32.mrf.mxu0
      %v344 = vadd.f32 %v302, %v343
      %v345 = vpop.f32.mrf.mxu0
      %v346 = vadd.f32 %v302, %v345
      %347 = vmatmul.bf16.gmra.mxu0 %v324
      %v348 = vpop.f32.mrf.mxu0
      %v349 = vadd.f32 %v302, %v348
      %v350 = vpop.f32.mrf.mxu0
      %v351 = vadd.f32 %v302, %v350
      %352 = vmatmul.bf16.gmra.mxu0 %v327
      %v353 = vpop.f32.mrf.mxu0
      %v354 = vadd.f32 %v302, %v353
      %v355 = vpop.f32.mrf.mxu0
      %v356 = vadd.f32 %v302, %v355
      %357 = vdwg.mxu0
      %v358 = vpack.c.bf16 %v339, %v339
      %v359 = vpack.c.bf16 %v341, %v341
      %v360 = vpack.c.bf16 %v344, %v344
      %v361 = vpack.c.bf16 %v346, %v346
      %v362 = vpack.c.bf16 %v349, %v349
      %v363 = vpack.c.bf16 %v351, %v351
      %v364 = vpack.c.bf16 %v354, %v354
      %v365 = vpack.c.bf16 %v356, %v356
      %v366 = vxor.u32 %v358, 2147516416
      %v367 = vxor.u32 %v359, 2147516416
      %v368 = vxor.u32 %v360, 2147516416
      %v369 = vxor.u32 %v361, 2147516416
      %v370 = vxor.u32 %v362, 2147516416
      %v371 = vxor.u32 %v363, 2147516416
      %v372 = vxor.u32 %v364, 2147516416
      %v373 = vxor.u32 %v365, 2147516416
      %v374 = vunpack.c.l.bf16 %v366
      %v375 = vunpack.c.l.bf16 %v367
      %v376 = vunpack.c.l.bf16 %v368
      %v377 = vunpack.c.l.bf16 %v369
      %v378 = vunpack.c.l.bf16 %v370
      %v379 = vunpack.c.l.bf16 %v371
      %v380 = vunpack.c.l.bf16 %v372
      %v381 = vunpack.c.l.bf16 %v373
      %v382 = vmul.f32 %v374, 1.442695
      %v383 = vpow.pop %v382
      %v384 = vmul.f32 %v375, 1.442695
      %v385 = vpow.pop %v384
      %v386 = vmul.f32 %v376, 1.442695
      %v387 = vpow.pop %v386
      %v388 = vmul.f32 %v377, 1.442695
      %v389 = vpow.pop %v388
      %v390 = vmul.f32 %v378, 1.442695
      %v391 = vpow.pop %v390
      %v392 = vmul.f32 %v379, 1.442695
      %v393 = vpow.pop %v392
      %v394 = vmul.f32 %v380, 1.442695
      %v395 = vpow.pop %v394
      %v396 = vmul.f32 %v381, 1.442695
      %v397 = vpow.pop %v396
      %v398 = vpack.c.bf16 %v383, %v383
      %v399 = vpack.c.bf16 %v385, %v385
      %v400 = vpack.c.bf16 %v387, %v387
      %v401 = vpack.c.bf16 %v389, %v389
      %v402 = vpack.c.bf16 %v391, %v391
      %v403 = vpack.c.bf16 %v393, %v393
      %v404 = vpack.c.bf16 %v395, %v395
      %v405 = vpack.c.bf16 %v397, %v397
      %v406 = vunpack.c.l.bf16 %v398
      %v407 = vunpack.c.l.bf16 %v399
      %v408 = vunpack.c.l.bf16 %v400
      %v409 = vunpack.c.l.bf16 %v401
      %v410 = vunpack.c.l.bf16 %v402
      %v411 = vunpack.c.l.bf16 %v403
      %v412 = vunpack.c.l.bf16 %v404
      %v413 = vunpack.c.l.bf16 %v405
      %v414 = vadd.f32 %v406, 1.0
      %v415 = vadd.f32 %v407, 1.0
      %v416 = vadd.f32 %v408, 1.0
      %v417 = vadd.f32 %v409, 1.0
      %v418 = vadd.f32 %v410, 1.0
      %v419 = vadd.f32 %v411, 1.0
      %v420 = vadd.f32 %v412, 1.0
      %v421 = vadd.f32 %v413, 1.0
      %v422 = vpack.c.bf16 %v414, %v414
      %v423 = vpack.c.bf16 %v415, %v415
      %v424 = vpack.c.bf16 %v416, %v416
      %v425 = vpack.c.bf16 %v417, %v417
      %v426 = vpack.c.bf16 %v418, %v418
      %v427 = vpack.c.bf16 %v419, %v419
      %v428 = vpack.c.bf16 %v420, %v420
      %v429 = vpack.c.bf16 %v421, %v421
      %v430 = vunpack.c.h.bf16 1065369472
      %v431 = vunpack.c.l.bf16 1065369472
      %v432 = vunpack.c.h.bf16 %v422
      %v433 = vunpack.c.l.bf16 %v422
      %v434 = vrcp.pop %v432
      %v435 = vmul.f32 %v430, %v434
      %v436 = vrcp.pop %v433
      %v437 = vmul.f32 %v431, %v436
      %v438 = vpack.c.bf16 %v435, %v437
      %v439 = vunpack.c.h.bf16 %v423
      %v440 = vunpack.c.l.bf16 %v423
      %v441 = vrcp.pop %v439
      %v442 = vmul.f32 %v430, %v441
      %v443 = vrcp.pop %v440
      %v444 = vmul.f32 %v431, %v443
      %v445 = vpack.c.bf16 %v442, %v444
      %v446 = vunpack.c.h.bf16 %v424
      %v447 = vunpack.c.l.bf16 %v424
      %v448 = vrcp.pop %v446
      %v449 = vmul.f32 %v430, %v448
      %v450 = vrcp.pop %v447
      %v451 = vmul.f32 %v431, %v450
      %v452 = vpack.c.bf16 %v449, %v451
      %v453 = vunpack.c.h.bf16 %v425
      %v454 = vunpack.c.l.bf16 %v425
      %v455 = vrcp.pop %v453
      %v456 = vmul.f32 %v430, %v455
      %v457 = vrcp.pop %v454
      %v458 = vmul.f32 %v431, %v457
      %v459 = vpack.c.bf16 %v456, %v458
      %v460 = vunpack.c.h.bf16 %v426
      %v461 = vunpack.c.l.bf16 %v426
      %v462 = vrcp.pop %v460
      %v463 = vmul.f32 %v430, %v462
      %v464 = vrcp.pop %v461
      %v465 = vmul.f32 %v431, %v464
      %v466 = vpack.c.bf16 %v463, %v465
      %v467 = vunpack.c.h.bf16 %v427
      %v468 = vunpack.c.l.bf16 %v427
      %v469 = vrcp.pop %v467
      %v470 = vmul.f32 %v430, %v469
      %v471 = vrcp.pop %v468
      %v472 = vmul.f32 %v431, %v471
      %v473 = vpack.c.bf16 %v470, %v472
      %v474 = vunpack.c.h.bf16 %v428
      %v475 = vunpack.c.l.bf16 %v428
      %v476 = vrcp.pop %v474
      %v477 = vmul.f32 %v430, %v476
      %v478 = vrcp.pop %v475
      %v479 = vmul.f32 %v431, %v478
      %v480 = vpack.c.bf16 %v477, %v479
      %v481 = vunpack.c.h.bf16 %v429
      %v482 = vunpack.c.l.bf16 %v429
      %v483 = vrcp.pop %v481
      %v484 = vmul.f32 %v430, %v483
      %v485 = vrcp.pop %v482
      %v486 = vmul.f32 %v431, %v485
      %v487 = vpack.c.bf16 %v484, %v486
      %v488 = vunpack.c.l.bf16 %v358
      %v489 = vunpack.c.l.bf16 %v359
      %v490 = vunpack.c.l.bf16 %v360
      %v491 = vunpack.c.l.bf16 %v361
      %v492 = vunpack.c.l.bf16 %v362
      %v493 = vunpack.c.l.bf16 %v363
      %v494 = vunpack.c.l.bf16 %v364
      %v495 = vunpack.c.l.bf16 %v365
      %v496 = vunpack.c.l.bf16 %v438
      %v497 = vunpack.c.l.bf16 %v445
      %v498 = vunpack.c.l.bf16 %v452
      %v499 = vunpack.c.l.bf16 %v459
      %v500 = vunpack.c.l.bf16 %v466
      %v501 = vunpack.c.l.bf16 %v473
      %v502 = vunpack.c.l.bf16 %v480
      %v503 = vunpack.c.l.bf16 %v487
      %v504 = vmul.f32 %v488, %v496
      %v505 = vmul.f32 %v489, %v497
      %v506 = vmul.f32 %v490, %v498
      %v507 = vmul.f32 %v491, %v499
      %v508 = vmul.f32 %v492, %v500
      %v509 = vmul.f32 %v493, %v501
      %v510 = vmul.f32 %v494, %v502
      %v511 = vmul.f32 %v495, %v503
      %v512 = vpack.c.bf16 %v505, %v504
      %v513 = vpack.c.bf16 %v507, %v506
      %v514 = vpack.c.bf16 %v509, %v508
      %v515 = vpack.c.bf16 %v511, %v510
      %v516 = vld [vmem:[%s3] sm:$0xf]
      %v517 = vld [vmem:[%s3 + $0x4] sm:$0xf]
      %v518 = vld [vmem:[%s3 + $0x8] sm:$0xf]
      %v519 = vld [vmem:[%s3 + $0xc] sm:$0xf]
      %v520 = vld [vmem:[%s3 + $0x10] sm:$0xf]
      %v521 = vld [vmem:[%s3 + $0x14] sm:$0xf]
      %v522 = vld [vmem:[%s3 + $0x18] sm:$0xf]
      %v523 = vld [vmem:[%s3 + $0x1c] sm:$0xf]
      %v524 = vld [vmem:[%s3 + $0x20] sm:$0xf]
      %v525 = vld [vmem:[%s3 + $0x24] sm:$0xf]
      %v526 = vld [vmem:[%s3 + $0x28] sm:$0xf]
      %v527 = vld [vmem:[%s3 + $0x2c] sm:$0xf]
      %v528 = vld [vmem:[%s3 + $0x30] sm:$0xf]
      %v529 = vld [vmem:[%s3 + $0x34] sm:$0xf]
      %v530 = vld [vmem:[%s3 + $0x38] sm:$0xf]
      %v531 = vld [vmem:[%s3 + $0x3c] sm:$0xf]
      %v532 = vld [vmem:[%s4] sm:$0x1]
      %v534 = vperm.slane %v532, 0
      %v552 = vunpack.c.l.b16 %v516
      %v553 = vunpack.c.l.b16 %v517
      %v554 = vunpack.c.l.b16 %v518
      %v555 = vunpack.c.l.b16 %v519
      %v556 = vunpack.c.l.b16 %v520
      %v557 = vunpack.c.l.b16 %v521
      %v558 = vunpack.c.l.b16 %v522
      %v559 = vunpack.c.l.b16 %v523
      %v560 = vunpack.c.l.b16 %v524
      %v561 = vunpack.c.l.b16 %v525
      %v562 = vunpack.c.l.b16 %v526
      %v563 = vunpack.c.l.b16 %v527
      %v564 = vunpack.c.l.b16 %v528
      %v565 = vunpack.c.l.b16 %v529
      %v566 = vunpack.c.l.b16 %v530
      %v567 = vunpack.c.l.b16 %v531
      %v568 = vpack.c.b16 %v553, %v552
      %v569 = vpack.c.b16 %v555, %v554
      %v570 = vpack.c.b16 %v557, %v556
      %v571 = vpack.c.b16 %v559, %v558
      %v572 = vpack.c.b16 %v561, %v560
      %v573 = vpack.c.b16 %v563, %v562
      %v574 = vpack.c.b16 %v565, %v564
      %v575 = vpack.c.b16 %v567, %v566
      %584 = vmatpush.bf16.msra.mxu0 %v575
      %585 = vmatpush.bf16.msra.mxu0 %v574
      %586 = vmatpush.bf16.msra.mxu0 %v573
      %587 = vmatpush.bf16.msra.mxu0 %v572
      %588 = vmatpush.bf16.msra.mxu0 %v571
      %589 = vmatpush.bf16.msra.mxu0 %v570
      %590 = vmatpush.bf16.msra.mxu0 %v569
      %591 = vmatpush.bf16.msra.mxu0 %v568
      %592 = vmatmul.bf16.gmra.mxu0 %v512
      %v593 = vpop.f32.mrf.mxu0
      %v594 = vadd.f32 %v534, %v593
      %v595 = vpop.f32.mrf.mxu0
      %v596 = vadd.f32 %v534, %v595
      %597 = vmatmul.bf16.gmra.mxu0 %v513
      %v598 = vpop.f32.mrf.mxu0
      %v599 = vadd.f32 %v534, %v598
      %v600 = vpop.f32.mrf.mxu0
      %v601 = vadd.f32 %v534, %v600
      %602 = vmatmul.bf16.gmra.mxu0 %v514
      %v603 = vpop.f32.mrf.mxu0
      %v604 = vadd.f32 %v534, %v603
      %v605 = vpop.f32.mrf.mxu0
      %v606 = vadd.f32 %v534, %v605
      %607 = vmatmul.bf16.gmra.mxu0 %v515
      %v608 = vpop.f32.mrf.mxu0
      %v609 = vadd.f32 %v534, %v608
      %v610 = vpop.f32.mrf.mxu0
      %v611 = vadd.f32 %v534, %v610
      %612 = vdwg.mxu0
      %v613 = vpack.c.bf16 %v594, %v594
      %v614 = vpack.c.bf16 %v596, %v596
      %v615 = vpack.c.bf16 %v599, %v599
      %v616 = vpack.c.bf16 %v601, %v601
      %v617 = vpack.c.bf16 %v604, %v604
      %v618 = vpack.c.bf16 %v606, %v606
      %v619 = vpack.c.bf16 %v609, %v609
      %v620 = vpack.c.bf16 %v611, %v611
      %v621 = vxor.u32 %v613, 2147516416
      %v622 = vxor.u32 %v614, 2147516416
      %v623 = vxor.u32 %v615, 2147516416
      %v624 = vxor.u32 %v616, 2147516416
      %v625 = vxor.u32 %v617, 2147516416
      %v626 = vxor.u32 %v618, 2147516416
      %v627 = vxor.u32 %v619, 2147516416
      %v628 = vxor.u32 %v620, 2147516416
      %v629 = vunpack.c.l.bf16 %v621
      %v630 = vunpack.c.l.bf16 %v622
      %v631 = vunpack.c.l.bf16 %v623
      %v632 = vunpack.c.l.bf16 %v624
      %v633 = vunpack.c.l.bf16 %v625
      %v634 = vunpack.c.l.bf16 %v626
      %v635 = vunpack.c.l.bf16 %v627
      %v636 = vunpack.c.l.bf16 %v628
      %v637 = vmul.f32 %v629, 1.442695
      %v638 = vpow.pop %v637
      %v639 = vmul.f32 %v630, 1.442695
      %v640 = vpow.pop %v639
      %v641 = vmul.f32 %v631, 1.442695
      %v642 = vpow.pop %v641
      %v643 = vmul.f32 %v632, 1.442695
      %v644 = vpow.pop %v643
      %v645 = vmul.f32 %v633, 1.442695
      %v646 = vpow.pop %v645
      %v647 = vmul.f32 %v634, 1.442695
      %v648 = vpow.pop %v647
      %v649 = vmul.f32 %v635, 1.442695
      %v650 = vpow.pop %v649
      %v651 = vmul.f32 %v636, 1.442695
      %v652 = vpow.pop %v651
      %v653 = vpack.c.bf16 %v638, %v638
      %v654 = vpack.c.bf16 %v640, %v640
      %v655 = vpack.c.bf16 %v642, %v642
      %v656 = vpack.c.bf16 %v644, %v644
      %v657 = vpack.c.bf16 %v646, %v646
      %v658 = vpack.c.bf16 %v648, %v648
      %v659 = vpack.c.bf16 %v650, %v650
      %v660 = vpack.c.bf16 %v652, %v652
      %v661 = vunpack.c.l.bf16 %v653
      %v662 = vunpack.c.l.bf16 %v654
      %v663 = vunpack.c.l.bf16 %v655
      %v664 = vunpack.c.l.bf16 %v656
      %v665 = vunpack.c.l.bf16 %v657
      %v666 = vunpack.c.l.bf16 %v658
      %v667 = vunpack.c.l.bf16 %v659
      %v668 = vunpack.c.l.bf16 %v660
      %v669 = vadd.f32 %v661, 1.0
      %v670 = vadd.f32 %v662, 1.0
      %v671 = vadd.f32 %v663, 1.0
      %v672 = vadd.f32 %v664, 1.0
      %v673 = vadd.f32 %v665, 1.0
      %v674 = vadd.f32 %v666, 1.0
      %v675 = vadd.f32 %v667, 1.0
      %v676 = vadd.f32 %v668, 1.0
      %v677 = vpack.c.bf16 %v669, %v669
      %v678 = vpack.c.bf16 %v670, %v670
      %v679 = vpack.c.bf16 %v671, %v671
      %v680 = vpack.c.bf16 %v672, %v672
      %v681 = vpack.c.bf16 %v673, %v673
      %v682 = vpack.c.bf16 %v674, %v674
      %v683 = vpack.c.bf16 %v675, %v675
      %v684 = vpack.c.bf16 %v676, %v676
      %v685 = vunpack.c.h.bf16 %v677
      %v686 = vunpack.c.l.bf16 %v677
      %v687 = vrcp.pop %v685
      %v688 = vmul.f32 %v430, %v687
      %v689 = vrcp.pop %v686
      %v690 = vmul.f32 %v431, %v689
      %v691 = vpack.c.bf16 %v688, %v690
      %v692 = vunpack.c.h.bf16 %v678
      %v693 = vunpack.c.l.bf16 %v678
      %v694 = vrcp.pop %v692
      %v695 = vmul.f32 %v430, %v694
      %v696 = vrcp.pop %v693
      %v697 = vmul.f32 %v431, %v696
      %v698 = vpack.c.bf16 %v695, %v697
      %v699 = vunpack.c.h.bf16 %v679
      %v700 = vunpack.c.l.bf16 %v679
      %v701 = vrcp.pop %v699
      %v702 = vmul.f32 %v430, %v701
      %v703 = vrcp.pop %v700
      %v704 = vmul.f32 %v431, %v703
      %v705 = vpack.c.bf16 %v702, %v704
      %v706 = vunpack.c.h.bf16 %v680
      %v707 = vunpack.c.l.bf16 %v680
      %v708 = vrcp.pop %v706
      %v709 = vmul.f32 %v430, %v708
      %v710 = vrcp.pop %v707
      %v711 = vmul.f32 %v431, %v710
      %v712 = vpack.c.bf16 %v709, %v711
      %v713 = vunpack.c.h.bf16 %v681
      %v714 = vunpack.c.l.bf16 %v681
      %v715 = vrcp.pop %v713
      %v716 = vmul.f32 %v430, %v715
      %v717 = vrcp.pop %v714
      %v718 = vmul.f32 %v431, %v717
      %v719 = vpack.c.bf16 %v716, %v718
      %v720 = vunpack.c.h.bf16 %v682
      %v721 = vunpack.c.l.bf16 %v682
      %v722 = vrcp.pop %v720
      %v723 = vmul.f32 %v430, %v722
      %v724 = vrcp.pop %v721
      %v725 = vmul.f32 %v431, %v724
      %v726 = vpack.c.bf16 %v723, %v725
      %v727 = vunpack.c.h.bf16 %v683
      %v728 = vunpack.c.l.bf16 %v683
      %v729 = vrcp.pop %v727
      %v730 = vmul.f32 %v430, %v729
      %v731 = vrcp.pop %v728
      %v732 = vmul.f32 %v431, %v731
      %v733 = vpack.c.bf16 %v730, %v732
      %v734 = vunpack.c.h.bf16 %v684
      %v735 = vunpack.c.l.bf16 %v684
      %v736 = vrcp.pop %v734
      %v737 = vmul.f32 %v430, %v736
      %v738 = vrcp.pop %v735
      %v739 = vmul.f32 %v431, %v738
      %v740 = vpack.c.bf16 %v737, %v739
      %v741 = vunpack.c.l.bf16 %v613
      %v742 = vunpack.c.l.bf16 %v614
      %v743 = vunpack.c.l.bf16 %v615
      %v744 = vunpack.c.l.bf16 %v616
      %v745 = vunpack.c.l.bf16 %v617
      %v746 = vunpack.c.l.bf16 %v618
      %v747 = vunpack.c.l.bf16 %v619
      %v748 = vunpack.c.l.bf16 %v620
      %v749 = vunpack.c.l.bf16 %v691
      %v750 = vunpack.c.l.bf16 %v698
      %v751 = vunpack.c.l.bf16 %v705
      %v752 = vunpack.c.l.bf16 %v712
      %v753 = vunpack.c.l.bf16 %v719
      %v754 = vunpack.c.l.bf16 %v726
      %v755 = vunpack.c.l.bf16 %v733
      %v756 = vunpack.c.l.bf16 %v740
      %v757 = vmul.f32 %v741, %v749
      %v758 = vmul.f32 %v742, %v750
      %v759 = vmul.f32 %v743, %v751
      %v760 = vmul.f32 %v744, %v752
      %v761 = vmul.f32 %v745, %v753
      %v762 = vmul.f32 %v746, %v754
      %v763 = vmul.f32 %v747, %v755
      %v764 = vmul.f32 %v748, %v756
      %v765 = vpack.c.bf16 %v758, %v757
      %v766 = vpack.c.bf16 %v760, %v759
      %v767 = vpack.c.bf16 %v762, %v761
      %v768 = vpack.c.bf16 %v764, %v763
      %v769 = vld [vmem:[%s5] sm:$0xf]
      %v770 = vld [vmem:[%s5 + $0x4] sm:$0xf]
      %v771 = vld [vmem:[%s5 + $0x8] sm:$0xf]
      %v772 = vld [vmem:[%s5 + $0xc] sm:$0xf]
      %v773 = vld [vmem:[%s5 + $0x10] sm:$0xf]
      %v774 = vld [vmem:[%s5 + $0x14] sm:$0xf]
      %v775 = vld [vmem:[%s5 + $0x18] sm:$0xf]
      %v776 = vld [vmem:[%s5 + $0x1c] sm:$0xf]
      %v777 = vld [vmem:[%s5 + $0x20] sm:$0xf]
      %v778 = vld [vmem:[%s5 + $0x24] sm:$0xf]
      %v779 = vld [vmem:[%s5 + $0x28] sm:$0xf]
      %v780 = vld [vmem:[%s5 + $0x2c] sm:$0xf]
      %v781 = vld [vmem:[%s5 + $0x30] sm:$0xf]
      %v782 = vld [vmem:[%s5 + $0x34] sm:$0xf]
      %v783 = vld [vmem:[%s5 + $0x38] sm:$0xf]
      %v784 = vld [vmem:[%s5 + $0x3c] sm:$0xf]
      %v785 = vld [vmem:[%s6] sm:$0x1]
      %v787 = vperm.slane %v785, 0
      %v805 = vunpack.c.l.b16 %v769
      %v806 = vunpack.c.l.b16 %v770
      %v807 = vunpack.c.l.b16 %v771
      %v808 = vunpack.c.l.b16 %v772
      %v809 = vunpack.c.l.b16 %v773
      %v810 = vunpack.c.l.b16 %v774
      %v811 = vunpack.c.l.b16 %v775
      %v812 = vunpack.c.l.b16 %v776
      %v813 = vunpack.c.l.b16 %v777
      %v814 = vunpack.c.l.b16 %v778
      %v815 = vunpack.c.l.b16 %v779
      %v816 = vunpack.c.l.b16 %v780
      %v817 = vunpack.c.l.b16 %v781
      %v818 = vunpack.c.l.b16 %v782
      %v819 = vunpack.c.l.b16 %v783
      %v820 = vunpack.c.l.b16 %v784
      %v821 = vpack.c.b16 %v806, %v805
      %v822 = vpack.c.b16 %v808, %v807
      %v823 = vpack.c.b16 %v810, %v809
      %v824 = vpack.c.b16 %v812, %v811
      %v825 = vpack.c.b16 %v814, %v813
      %v826 = vpack.c.b16 %v816, %v815
      %v827 = vpack.c.b16 %v818, %v817
      %v828 = vpack.c.b16 %v820, %v819
      %837 = vmatpush.bf16.msra.mxu0 %v828
      %838 = vmatpush.bf16.msra.mxu0 %v827
      %839 = vmatpush.bf16.msra.mxu0 %v826
      %840 = vmatpush.bf16.msra.mxu0 %v825
      %841 = vmatpush.bf16.msra.mxu0 %v824
      %842 = vmatpush.bf16.msra.mxu0 %v823
      %843 = vmatpush.bf16.msra.mxu0 %v822
      %844 = vmatpush.bf16.msra.mxu0 %v821
      %845 = vmatmul.bf16.gmra.mxu0 %v765
      %v846 = vpop.f32.mrf.mxu0
      %v847 = vadd.f32 %v787, %v846
      %v848 = vpop.f32.mrf.mxu0
      %v849 = vadd.f32 %v787, %v848
      %850 = vmatmul.bf16.gmra.mxu0 %v766
      %v851 = vpop.f32.mrf.mxu0
      %v852 = vadd.f32 %v787, %v851
      %v853 = vpop.f32.mrf.mxu0
      %v854 = vadd.f32 %v787, %v853
      %855 = vmatmul.bf16.gmra.mxu0 %v767
      %v856 = vpop.f32.mrf.mxu0
      %v857 = vadd.f32 %v787, %v856
      %v858 = vpop.f32.mrf.mxu0
      %v859 = vadd.f32 %v787, %v858
      %860 = vmatmul.bf16.gmra.mxu0 %v768
      %v861 = vpop.f32.mrf.mxu0
      %v862 = vadd.f32 %v787, %v861
      %v863 = vpop.f32.mrf.mxu0
      %v864 = vadd.f32 %v787, %v863
      %865 = vdwg.mxu0
      %vm866 = vcmask 130048
      %867 = vst.msk [vmem:[%s280] sm:$0xff] %vm866, %v847
      %868 = vst.msk [vmem:[%s280 + $0x8] sm:$0xff] %vm866, %v849
      %869 = vst.msk [vmem:[%s280 + $0x10] sm:$0xff] %vm866, %v852
      %870 = vst.msk [vmem:[%s280 + $0x18] sm:$0xff] %vm866, %v854
      %871 = vst.msk [vmem:[%s280 + $0x20] sm:$0xff] %vm866, %v857
      %872 = vst.msk [vmem:[%s280 + $0x28] sm:$0xff] %vm866, %v859
      %873 = vst.msk [vmem:[%s280 + $0x30] sm:$0xff] %vm866, %v862
      %874 = vst.msk [vmem:[%s280 + $0x38] sm:$0xff] %vm866, %v864
      %s875 = smul.u32 8, %s18
      %p876 = scmp.lt.s32.totalorder %s875, 15
      %s877 = scalar_select %p876, %s875, 15
      %s878 = smul.addr %s877, 8
      %s879 = scalar_lea.vmem %s7, %s878
      // Predicated region
      $region49: #{tpu_custom_call.1} parent=47 // pred_check
        %p880 = pneg %p188
      $region50: #{tpu_custom_call.1} parent=47 // pred_check_branch
        %882 = sbr.rel (%p880) target = $region52
      $region51: #{tpu_custom_call.1} parent=47 // pred_region
        %s883 = smul.u32 8, %s18
      $region52: #{tpu_custom_call.1} parent=47 // pred_fallthru
        _
    $region48: #{tpu_custom_call.1} parent=5 // pred_fallthru
      _
    %p884 = scmp.le.s32.totalorder 2, %s13
    // Predicated region
    $region53: #{tpu_custom_call.1} parent=5 // pred_check
      %p885 = pneg %p884
    $region54: #{tpu_custom_call.1} parent=5 // pred_check_branch
      %887 = sbr.rel (%p885) target = $region56
    $region55: #{tpu_custom_call.1} parent=5 // pred_region
      %s888 = ssub.s32 %s13, 2
      // Predicated region
      $region57: #{tpu_custom_call.1} parent=55 // pred_check
        %p889 = pneg %p194
      $region58: #{tpu_custom_call.1} parent=55 // pred_check_branch
        %891 = sbr.rel (%p889) target = $region60
      $region59: #{tpu_custom_call.1} parent=55 // pred_region
        %s892 = smul.u32 8, %s19
        %p893 = scmp.lt.s32.totalorder %s892, 15
        %s894 = scalar_select %p893, %s892, 15
        %s895 = smul.addr %s894, 8
        %s896 = scalar_lea.vmem %s7, %s895
      $region60: #{tpu_custom_call.1} parent=55 // pred_fallthru
        _
    $region56: #{tpu_custom_call.1} parent=5 // pred_fallthru
      _
  $region6: #{tpu_custom_call.1} parent=0 // loop_footer
    %s17 = sadd.s32 1, %s13
  $region7: #{tpu_custom_call.1} parent=0 // loop_footer_branch
    %12 = sbr.rel target = $region3
  $region8: #{tpu_custom_call.1} parent=0 // loop_exit
    _

</llo_original>
